<compile_context>
chip_gen: v5e
topology: v5e:2x2
jax: 0.10.0
libtpu: 0.0.40
codegen_flags: <defaults>
</compile_context>

<pallas_src>
import jax
import jax.numpy as jnp
import numpy as np
from jax.experimental import pallas as pl
from jax.experimental.pallas import tpu as pltpu

F = 16          # padded feature width carried through the GCN stage
PROWS = 80      # rows of the per-layer packed parameter slab
LANES = 128     # lane width of the CNN-head working arrays
CSTRIDE = 16    # lane stride per spatial-W position (graph index) in the CNN head
WG = 5          # number of graphs == CNN spatial width


# ----------------------------------------------------------------------------------
# GCN kernel: one grid step = one graph, all 4 EdgeConv layers fused.
#   e_out   = ReLU(BN_Lin([edge_feat | hid[src]]))    (mlp1, concat split into two halves)
#   reduced = mean over incoming edges of e_out
#   hid     = ReLU(BN_Lin([reduced | hid]))           (mlp2)
# All tensors are zero-padded to 16 features; padded rows/cols of the packed weights are zero,
# so the padded lanes stay exactly zero through every layer.
# ----------------------------------------------------------------------------------
def gcn_kernel(nf_ref, ef_ref, soh_ref, dm_ref, prm_ref, out_ref):
    f32 = jnp.float32
    hid = nf_ref[...]        # [N, F]  node state (feature-padded)
    ef = ef_ref[...]         # [E, F]  edge features (feature-padded)
    soh = soh_ref[...]       # [E, N]  one-hot of src node per edge
    dm = dm_ref[...]         # [N, E]  mean-scatter over incoming edges (0 rows if deg==0)
    for layer in range(4):
        P = prm_ref[layer]                          # [80, F] packed layer parameters
        w1a, w1b = P[0:16], P[16:32]
        w2a, w2b = P[32:48], P[48:64]
        s1a, sh1a, s1b, sh1b = P[64:65], P[65:66], P[66:67], P[67:68]
        s2a, sh2a, s2b, sh2b = P[68:69], P[69:70], P[70:71], P[71:72]
        b1, b2 = P[72:73], P[73:74]
        # mlp1 on concat(edge_feat, hid[src])
        hid_src = jnp.dot(soh, hid, preferred_element_type=f32)              # [E, F]
        e_out = jnp.maximum(
            jnp.dot(ef * s1a + sh1a, w1a, preferred_element_type=f32)
            + jnp.dot(hid_src * s1b + sh1b, w1b, preferred_element_type=f32)
            + b1, 0.0)                                                        # [E, F]
        # mean over incoming edges
        reduced = jnp.dot(dm, e_out, preferred_element_type=f32)             # [N, F]
        # mlp2 on concat(reduced, hid)
        hid = jnp.maximum(
            jnp.dot(reduced * s2a + sh2a, w2a, preferred_element_type=f32)
            + jnp.dot(hid * s2b + sh2b, w2b, preferred_element_type=f32)
            + b2, 0.0)                                                        # [N, F]
    out_ref[...] = hid


def gcn_forward(nfeat_p, efeat_p, src_oh, dst_mean, prm_slab):
    G, N, Fp = nfeat_p.shape
    E = efeat_p.shape[1]
    return pl.pallas_call(
        gcn_kernel,
        out_shape=jax.ShapeDtypeStruct((G, N, Fp), jnp.float32),
        grid_spec=pltpu.PrefetchScalarGridSpec(
            num_scalar_prefetch=0,
            grid=(G,),
            in_specs=[
                pl.BlockSpec((None, N, Fp), lambda g: (g, 0, 0)),
                pl.BlockSpec((None, E, Fp), lambda g: (g, 0, 0)),
                pl.BlockSpec((None, E, N), lambda g: (g, 0, 0)),
                pl.BlockSpec((None, N, E), lambda g: (g, 0, 0)),
                pl.BlockSpec((None, 4, PROWS, Fp), lambda g: (g, 0, 0, 0)),
            ],
            out_specs=pl.BlockSpec((None, N, Fp), lambda g: (g, 0, 0)),
        ),
        compiler_params=pltpu.CompilerParams(dimension_semantics=("parallel",)),
        cost_estimate=pl.CostEstimate(flops=700_000, transcendentals=0,
                                      bytes_accessed=130_000),
    )(nfeat_p, efeat_p, src_oh, dst_mean, prm_slab)


# ----------------------------------------------------------------------------------
# CNN head kernel: Conv2d(10->5)+ReLU -> Conv2d(5->2)+ReLU -> Conv2d(2->1), 3x3, pad 1.
# W(=5 graphs) and channels are packed into 128 lanes; each conv = 3 per-kh lane matmuls,
# H taps combined with 8x8 shift matrices (zero boundary).  Then
#   p  = sum(sigmoid(A), axis=1)/5
#   rb = eye(5)[argmax(A, axis=1)]      (softmax is monotonic; first-max like torch.max)
# Output: one lane-dense [N, 128] slab (lanes 0..4 = rb one-hot, lane 8 = p).
# ----------------------------------------------------------------------------------
def cnn_head_kernel(h_ref, w1_ref, w2_ref, w3_ref, b_ref, out_ref):
    f32 = jnp.float32
    H = out_ref.shape[0]
    # H-shift matrices: (sdn @ t)[h] = t[h-1] (0 at h=0);  (sup @ t)[h] = t[h+1] (0 at h=H-1)
    r = jax.lax.broadcasted_iota(jnp.int32, (H, H), 0)
    c = jax.lax.broadcasted_iota(jnp.int32, (H, H), 1)
    sdn = (r == c + 1).astype(f32)
    sup = (r + 1 == c).astype(f32)

    def combine(t0, t1, t2, brow):
        return (jnp.dot(sdn, t0, preferred_element_type=f32) + t1
                + jnp.dot(sup, t2, preferred_element_type=f32) + brow)

    # ---- conv1: 10 -> 5 channels; input = 5 per-graph [H,16] blocks ----
    hs = [h_ref[g] for g in range(WG)]
    taps = []
    for kh in range(3):
        acc = jnp.dot(hs[0], w1_ref[kh * WG + 0], preferred_element_type=f32)
        for g in range(1, WG):
            acc = acc + jnp.dot(hs[g], w1_ref[kh * WG + g], preferred_element_type=f32)
        taps.append(acc)                                           # [H, 128]
    y1 = jnp.maximum(combine(taps[0], taps[1], taps[2], b_ref[0:1, :]), 0.0)
    # ---- conv2: 5 -> 2 ----
    t = [jnp.dot(y1, w2_ref[kh], preferred_element_type=f32) for kh in range(3)]
    y2 = jnp.maximum(combine(t[0], t[1], t[2], b_ref[1:2, :]), 0.0)
    # ---- conv3: 2 -> 1; output lane w holds A[:, w], lanes >= 5 are exactly 0 ----
    t = [jnp.dot(y2, w3_ref[kh], preferred_element_type=f32) for kh in range(3)]
    A = combine(t[0], t[1], t[2], b_ref[2:3, :])                   # [H, 128]

    col = jax.lax.broadcasted_iota(jnp.int32, (H, LANES), 1)
    valid = col < WG
    p = jnp.sum(jnp.where(valid, jax.nn.sigmoid(A), 0.0), axis=1, keepdims=True) / 5.0
    Am = jnp.where(valid, A, -jnp.inf)
    m = jnp.max(Am, axis=1, keepdims=True)
    idx = jnp.min(jnp.where(Am == m, col, LANES), axis=1, keepdims=True)   # first max index
    out_ref[...] = (col == idx).astype(f32) + jnp.where(col == 8, p, 0.0)


def cnn_forward(hid_all, w1b, w2b, w3b, brow):
    N = hid_all.shape[1]
    out = pl.pallas_call(
        cnn_head_kernel,
        out_shape=jax.ShapeDtypeStruct((N, LANES), jnp.float32),
        cost_estimate=pl.CostEstimate(flops=2_300_000, transcendentals=1_024,
                                      bytes_accessed=540_000),
    )(hid_all, w1b, w2b, w3b, brow)
    return out[:, 8], out[:, :WG]


def model_forward(nfeat_p, efeat_p, src_oh, dst_mean, gcn_slab, w1b, w2b, w3b, brow):
    hid_all = gcn_forward(nfeat_p, efeat_p, src_oh, dst_mean, gcn_slab)    # [5, N, 16]
    return cnn_forward(hid_all, w1b, w2b, w3b, brow)                       # p [N], rb [N,5]


# ------------------------------ parameter packing (glue) ---------------------------
def pack_gcn_params(gcn_params):
    """Pack 5 graphs x 4 layers of ((s1,sh1,w1,b1),(s2,sh2,w2,b2)) into [5,4,80,16]."""
    De = 2
    G = len(gcn_params)
    slab = np.zeros((G, 4, PROWS, F), np.float32)
    for g, layers in enumerate(gcn_params):
        for l, ((s1, sh1, w1, b1), (s2, sh2, w2, b2)) in enumerate(layers):
            s1, sh1, w1, b1 = (np.asarray(a, np.float32) for a in (s1, sh1, w1, b1))
            s2, sh2, w2, b2 = (np.asarray(a, np.float32) for a in (s2, sh2, w2, b2))
            d1 = w1.shape[1]                 # mlp1 output width
            dh = w1.shape[0] - De            # current hid width
            dout = w2.shape[1]               # mlp2 output width (new hid)
            S = slab[g, l]
            S[0:De, :d1] = w1[:De]           # W1a (edge-feature half)
            S[16:16 + dh, :d1] = w1[De:]     # W1b (src-hid half)
            S[32:32 + d1, :dout] = w2[:d1]   # W2a (reduced half)
            S[48:48 + dh, :dout] = w2[d1:]   # W2b (hid half)
            S[64, :De] = s1[0, :De]; S[65, :De] = sh1[0, :De]
            S[66, :dh] = s1[0, De:]; S[67, :dh] = sh1[0, De:]
            S[68, :d1] = s2[0, :d1]; S[69, :d1] = sh2[0, :d1]
            S[70, :dh] = s2[0, d1:]; S[71, :dh] = sh2[0, d1:]
            S[72, :d1] = b1[0];      S[73, :dout] = b2[0]
    return jnp.asarray(slab)


def pack_cnn_params(cnn_params):
    """Turn HWIO 3x3 conv weights into per-kh lane-dense matmul matrices."""
    (w1, b1), (w2, b2), (w3, b3) = cnn_params
    w1, w2, w3 = (np.asarray(w, np.float32) for w in (w1, w2, w3))
    b1, b2, b3 = (np.asarray(b, np.float32) for b in (b1, b2, b3))
    big1 = np.zeros((3 * WG, CSTRIDE, LANES), np.float32)   # [kh*5+graph, cin_pad, lanes_out]
    big2 = np.zeros((3, LANES, LANES), np.float32)
    big3 = np.zeros((3, LANES, LANES), np.float32)
    brow = np.zeros((8, LANES), np.float32)
    for kh in range(3):
        for wi in range(WG):
            for wo in range(WG):
                kw = wi - wo + 1
                if 0 <= kw <= 2:
                    big1[kh * WG + wi, :10, wo * CSTRIDE:wo * CSTRIDE + 5] = w1[kh, kw]
                    big2[kh, wi * CSTRIDE:wi * CSTRIDE + 5,
                         wo * CSTRIDE:wo * CSTRIDE + 2] = w2[kh, kw]
                    big3[kh, wi * CSTRIDE:wi * CSTRIDE + 2, wo] = w3[kh, kw, :, 0]
    for wo in range(WG):
        brow[0, wo * CSTRIDE:wo * CSTRIDE + 5] = b1[0]
        brow[1, wo * CSTRIDE:wo * CSTRIDE + 2] = b2[0]
        brow[2, wo] = b3[0, 0]
    return jnp.asarray(big1), jnp.asarray(big2), jnp.asarray(big3), jnp.asarray(brow)


# ---------------------------- pure-JAX reference ----------------------------------
def edgeconv_ref(hid, ef, src_oh, dst_mean, params):
    (s1, sh1, w1, b1), (s2, sh2, w2, b2) = params
    hid_src = src_oh @ hid
    cat1 = jnp.concatenate([ef, hid_src], axis=1)
    e_out = jax.nn.relu((cat1 * s1 + sh1) @ w1 + b1)
    reduced = dst_mean @ e_out
    cat2 = jnp.concatenate([reduced, hid], axis=1)
    return jax.nn.relu((cat2 * s2 + sh2) @ w2 + b2)


def model_ref(graphs, gcn_params, cnn_params):
    X = []
    for k in range(5):
        g = graphs[k]
        hid = g['nfeat']
        for lp in gcn_params[k]:
            hid = edgeconv_ref(hid, g['efeat'], g['src_oh'], g['dst_mean'], lp)
        X.append(hid)
    x = jnp.transpose(jnp.stack(X, axis=0), (1, 0, 2))[None]          # [1, N, 5, 10] NHWC
    (w1, b1), (w2, b2), (w3, b3) = cnn_params
    y = x
    for w, b, act in ((w1, b1, True), (w2, b2, True), (w3, b3, False)):
        y = jax.lax.conv_general_dilated(y, w, (1, 1), 'SAME',
                                         dimension_numbers=('NHWC', 'HWIO', 'NHWC'))
        y = y + b.reshape(1, 1, 1, -1)
        if act:
            y = jax.nn.relu(y)
    A = y[0, :, :, 0]
    p = jnp.sum(jax.nn.sigmoid(A), axis=1) / 5.0
    rb = jnp.eye(5, dtype=jnp.float32)[jnp.argmax(A, axis=1)]
    return p, rb


# ------------------------------ parameter init -------------------------------------
def init_mlp(key, din, dout):
    k1, k2, k3, k4 = jax.random.split(key, 4)
    scale = 1.0 + 0.1 * jax.random.normal(k1, (1, din), jnp.float32)   # eval-mode BN scale
    shift = 0.05 * jax.random.normal(k2, (1, din), jnp.float32)        # eval-mode BN shift
    w = jax.random.normal(k3, (din, dout), jnp.float32) / np.sqrt(din)
    b = 0.05 * jax.random.normal(k4, (1, dout), jnp.float32)
    return (scale, shift, w, b)


def init_gcn(key):
    # (mlp1_in, mlp1_out), (mlp2_in, mlp2_out) per EdgeConv: [3,9]/[10,10] then 3x [12,10]/[20,10]
    dims = [((3, 9), (10, 10))] + [((12, 10), (20, 10))] * 3
    layers = []
    for m1, m2 in dims:
        key, k1, k2 = jax.random.split(key, 3)
        layers.append((init_mlp(k1, *m1), init_mlp(k2, *m2)))
    return layers


def init_conv(key, cin, cout):
    k1, k2 = jax.random.split(key)
    w = jax.random.normal(k1, (3, 3, cin, cout), jnp.float32) / np.sqrt(cin * 9)  # HWIO
    b = 0.05 * jax.random.normal(k2, (1, cout), jnp.float32)
    return w, b


if __name__ == "__main__":
    key = jax.random.PRNGKey(0)
    N, E, G = 8, 16, 5          # nodes, edges per graph, 5 graphs (one per GCN)

    graphs = []
    kg = key
    for _ in range(G):
        kg, k1, k2, k3, k4 = jax.random.split(kg, 5)
        src = jax.random.randint(k1, (E,), 0, N)
        dst = jax.random.randint(k2, (E,), 0, N)
        nfeat = jax.random.normal(k3, (N, 1), jnp.float32)   # node feature dim 1
        efeat = jax.random.normal(k4, (E, 2), jnp.float32)   # edge feature dim 2
        src_oh = jax.nn.one_hot(src, N, dtype=jnp.float32)               # [E, N]
        dst_oh = jax.nn.one_hot(dst, N, dtype=jnp.float32)               # [E, N]
        deg = jnp.sum(dst_oh, axis=0)                                    # in-degree
        dst_mean = dst_oh.T / jnp.maximum(deg, 1.0)[:, None]             # [N, E] mean-scatter
        graphs.append(dict(nfeat=nfeat, efeat=efeat, src_oh=src_oh, dst_mean=dst_mean))

    kg, *gkeys = jax.random.split(kg, G + 1)
    gcn_params = [init_gcn(gk) for gk in gkeys]
    kg, kc1, kc2, kc3 = jax.random.split(kg, 4)
    cnn_params = (init_conv(kc1, 10, 5), init_conv(kc2, 5, 2), init_conv(kc3, 2, 1))

    # ---- pack graph tensors and parameters into padded, lane-friendly slabs (done once) ----
    nfeat_p = np.zeros((G, N, F), np.float32)
    efeat_p = np.zeros((G, E, F), np.float32)
    soh_all = np.zeros((G, E, N), np.float32)
    dm_all = np.zeros((G, N, E), np.float32)
    for g, gr in enumerate(graphs):
        nfeat_p[g, :, :1] = np.asarray(gr['nfeat'])
        efeat_p[g, :, :2] = np.asarray(gr['efeat'])
        soh_all[g] = np.asarray(gr['src_oh'])
        dm_all[g] = np.asarray(gr['dst_mean'])
    gcn_slab = pack_gcn_params(gcn_params)                     # [5, 4, 80, 16]
    w1b, w2b, w3b, brow = pack_cnn_params(cnn_params)

    fwd = jax.jit(model_forward)
    p, rb = fwd(jnp.asarray(nfeat_p), jnp.asarray(efeat_p), jnp.asarray(soh_all),
                jnp.asarray(dm_all), gcn_slab, w1b, w2b, w3b, brow)
    jax.block_until_ready((p, rb))

    p_ref, rb_ref = model_ref(graphs, gcn_params, cnn_params)
    assert p.shape == (N,) and rb.shape == (N, 5)
    assert np.allclose(np.asarray(p), np.asarray(p_ref), atol=1e-3, rtol=1e-3), "p mismatch"
    assert np.allclose(np.asarray(rb), np.asarray(rb_ref), atol=1e-5), "rb mismatch"
    print("KERNEL_OK")
</pallas_src>

<mosaic_0001>
module attributes {stable_mosaic.version = 11 : i64} {
  func.func @cnn_head_kernel(%arg0: memref<5x8x16xf32, #tpu.memory_space<vmem>>, %arg1: memref<15x16x128xf32, #tpu.memory_space<vmem>>, %arg2: memref<3x128x128xf32, #tpu.memory_space<vmem>>, %arg3: memref<3x128x128xf32, #tpu.memory_space<vmem>>, %arg4: memref<8x128xf32, #tpu.memory_space<vmem>>, %arg5: memref<8x128xf32, #tpu.memory_space<vmem>>) attributes {dimension_semantics = [], scalar_prefetch = 0 : i64, scratch_operands = 0 : i64, tpu.core_type = #tpu.core_type<tc>} {
    %0 = tpu.iota {dimensions = array<i32: 0>} : vector<8x8xi32>
    %1 = tpu.iota {dimensions = array<i32: 1>} : vector<8x8xi32>
    %c1_i32 = arith.constant 1 : i32
    %2 = vector.broadcast %c1_i32 : i32 to vector<8x8xi32>
    %3 = arith.addi %1, %2 : vector<8x8xi32>
    %4 = arith.cmpi eq, %0, %3 : vector<8x8xi32>
    %5 = arith.extui %4 : vector<8x8xi1> to vector<8x8xi32>
    %6 = arith.sitofp %5 : vector<8x8xi32> to vector<8x8xf32>
    %c1_i32_0 = arith.constant 1 : i32
    %7 = vector.broadcast %c1_i32_0 : i32 to vector<8x8xi32>
    %8 = arith.addi %0, %7 : vector<8x8xi32>
    %9 = arith.cmpi eq, %8, %1 : vector<8x8xi32>
    %10 = arith.extui %9 : vector<8x8xi1> to vector<8x8xi32>
    %11 = arith.sitofp %10 : vector<8x8xi32> to vector<8x8xf32>
    %c0 = arith.constant 0 : index
    %c0_1 = arith.constant 0 : index
    %c0_2 = arith.constant 0 : index
    %12 = vector.load %arg0[%c0, %c0_1, %c0_2] : memref<5x8x16xf32, #tpu.memory_space<vmem>>, vector<1x8x16xf32>
    %13 = vector.shape_cast %12 : vector<1x8x16xf32> to vector<8x16xf32>
    %c1 = arith.constant 1 : index
    %c0_3 = arith.constant 0 : index
    %c0_4 = arith.constant 0 : index
    %14 = vector.load %arg0[%c1, %c0_3, %c0_4] : memref<5x8x16xf32, #tpu.memory_space<vmem>>, vector<1x8x16xf32>
    %15 = vector.shape_cast %14 : vector<1x8x16xf32> to vector<8x16xf32>
    %c2 = arith.constant 2 : index
    %c0_5 = arith.constant 0 : index
    %c0_6 = arith.constant 0 : index
    %16 = vector.load %arg0[%c2, %c0_5, %c0_6] : memref<5x8x16xf32, #tpu.memory_space<vmem>>, vector<1x8x16xf32>
    %17 = vector.shape_cast %16 : vector<1x8x16xf32> to vector<8x16xf32>
    %c3 = arith.constant 3 : index
    %c0_7 = arith.constant 0 : index
    %c0_8 = arith.constant 0 : index
    %18 = vector.load %arg0[%c3, %c0_7, %c0_8] : memref<5x8x16xf32, #tpu.memory_space<vmem>>, vector<1x8x16xf32>
    %19 = vector.shape_cast %18 : vector<1x8x16xf32> to vector<8x16xf32>
    %c4 = arith.constant 4 : index
    %c0_9 = arith.constant 0 : index
    %c0_10 = arith.constant 0 : index
    %20 = vector.load %arg0[%c4, %c0_9, %c0_10] : memref<5x8x16xf32, #tpu.memory_space<vmem>>, vector<1x8x16xf32>
    %21 = vector.shape_cast %20 : vector<1x8x16xf32> to vector<8x16xf32>
    %c0_11 = arith.constant 0 : index
    %c0_12 = arith.constant 0 : index
    %c0_13 = arith.constant 0 : index
    %22 = vector.load %arg1[%c0_11, %c0_12, %c0_13] : memref<15x16x128xf32, #tpu.memory_space<vmem>>, vector<1x16x128xf32>
    %23 = vector.shape_cast %22 : vector<1x16x128xf32> to vector<16x128xf32>
    %cst = arith.constant dense<0.000000e+00> : vector<8x128xf32>
    %24 = tpu.matmul %13, %23, %cst {dimension_numbers = #tpu.dot_dimension_numbers<[1], [0], [0], [1], [0, 0, 1, 1], [], []>} : vector<8x16xf32>, vector<16x128xf32>, vector<8x128xf32> -> vector<8x128xf32>
    %c1_14 = arith.constant 1 : index
    %c0_15 = arith.constant 0 : index
    %c0_16 = arith.constant 0 : index
    %25 = vector.load %arg1[%c1_14, %c0_15, %c0_16] : memref<15x16x128xf32, #tpu.memory_space<vmem>>, vector<1x16x128xf32>
    %26 = vector.shape_cast %25 : vector<1x16x128xf32> to vector<16x128xf32>
    %cst_17 = arith.constant dense<0.000000e+00> : vector<8x128xf32>
    %27 = tpu.matmul %15, %26, %cst_17 {dimension_numbers = #tpu.dot_dimension_numbers<[1], [0], [0], [1], [0, 0, 1, 1], [], []>} : vector<8x16xf32>, vector<16x128xf32>, vector<8x128xf32> -> vector<8x128xf32>
    %28 = arith.addf %24, %27 : vector<8x128xf32>
    %c2_18 = arith.constant 2 : index
    %c0_19 = arith.constant 0 : index
    %c0_20 = arith.constant 0 : index
    %29 = vector.load %arg1[%c2_18, %c0_19, %c0_20] : memref<15x16x128xf32, #tpu.memory_space<vmem>>, vector<1x16x128xf32>
    %30 = vector.shape_cast %29 : vector<1x16x128xf32> to vector<16x128xf32>
    %cst_21 = arith.constant dense<0.000000e+00> : vector<8x128xf32>
    %31 = tpu.matmul %17, %30, %cst_21 {dimension_numbers = #tpu.dot_dimension_numbers<[1], [0], [0], [1], [0, 0, 1, 1], [], []>} : vector<8x16xf32>, vector<16x128xf32>, vector<8x128xf32> -> vector<8x128xf32>
    %32 = arith.addf %28, %31 : vector<8x128xf32>
    %c3_22 = arith.constant 3 : index
    %c0_23 = arith.constant 0 : index
    %c0_24 = arith.constant 0 : index
    %33 = vector.load %arg1[%c3_22, %c0_23, %c0_24] : memref<15x16x128xf32, #tpu.memory_space<vmem>>, vector<1x16x128xf32>
    %34 = vector.shape_cast %33 : vector<1x16x128xf32> to vector<16x128xf32>
    %cst_25 = arith.constant dense<0.000000e+00> : vector<8x128xf32>
    %35 = tpu.matmul %19, %34, %cst_25 {dimension_numbers = #tpu.dot_dimension_numbers<[1], [0], [0], [1], [0, 0, 1, 1], [], []>} : vector<8x16xf32>, vector<16x128xf32>, vector<8x128xf32> -> vector<8x128xf32>
    %36 = arith.addf %32, %35 : vector<8x128xf32>
    %c4_26 = arith.constant 4 : index
    %c0_27 = arith.constant 0 : index
    %c0_28 = arith.constant 0 : index
    %37 = vector.load %arg1[%c4_26, %c0_27, %c0_28] : memref<15x16x128xf32, #tpu.memory_space<vmem>>, vector<1x16x128xf32>
    %38 = vector.shape_cast %37 : vector<1x16x128xf32> to vector<16x128xf32>
    %cst_29 = arith.constant dense<0.000000e+00> : vector<8x128xf32>
    %39 = tpu.matmul %21, %38, %cst_29 {dimension_numbers = #tpu.dot_dimension_numbers<[1], [0], [0], [1], [0, 0, 1, 1], [], []>} : vector<8x16xf32>, vector<16x128xf32>, vector<8x128xf32> -> vector<8x128xf32>
    %40 = arith.addf %36, %39 : vector<8x128xf32>
    %c5 = arith.constant 5 : index
    %c0_30 = arith.constant 0 : index
    %c0_31 = arith.constant 0 : index
    %41 = vector.load %arg1[%c5, %c0_30, %c0_31] : memref<15x16x128xf32, #tpu.memory_space<vmem>>, vector<1x16x128xf32>
    %42 = vector.shape_cast %41 : vector<1x16x128xf32> to vector<16x128xf32>
    %cst_32 = arith.constant dense<0.000000e+00> : vector<8x128xf32>
    %43 = tpu.matmul %13, %42, %cst_32 {dimension_numbers = #tpu.dot_dimension_numbers<[1], [0], [0], [1], [0, 0, 1, 1], [], []>} : vector<8x16xf32>, vector<16x128xf32>, vector<8x128xf32> -> vector<8x128xf32>
    %c6 = arith.constant 6 : index
    %c0_33 = arith.constant 0 : index
    %c0_34 = arith.constant 0 : index
    %44 = vector.load %arg1[%c6, %c0_33, %c0_34] : memref<15x16x128xf32, #tpu.memory_space<vmem>>, vector<1x16x128xf32>
    %45 = vector.shape_cast %44 : vector<1x16x128xf32> to vector<16x128xf32>
    %cst_35 = arith.constant dense<0.000000e+00> : vector<8x128xf32>
    %46 = tpu.matmul %15, %45, %cst_35 {dimension_numbers = #tpu.dot_dimension_numbers<[1], [0], [0], [1], [0, 0, 1, 1], [], []>} : vector<8x16xf32>, vector<16x128xf32>, vector<8x128xf32> -> vector<8x128xf32>
    %47 = arith.addf %43, %46 : vector<8x128xf32>
    %c7 = arith.constant 7 : index
    %c0_36 = arith.constant 0 : index
    %c0_37 = arith.constant 0 : index
    %48 = vector.load %arg1[%c7, %c0_36, %c0_37] : memref<15x16x128xf32, #tpu.memory_space<vmem>>, vector<1x16x128xf32>
    %49 = vector.shape_cast %48 : vector<1x16x128xf32> to vector<16x128xf32>
    %cst_38 = arith.constant dense<0.000000e+00> : vector<8x128xf32>
    %50 = tpu.matmul %17, %49, %cst_38 {dimension_numbers = #tpu.dot_dimension_numbers<[1], [0], [0], [1], [0, 0, 1, 1], [], []>} : vector<8x16xf32>, vector<16x128xf32>, vector<8x128xf32> -> vector<8x128xf32>
    %51 = arith.addf %47, %50 : vector<8x128xf32>
    %c8 = arith.constant 8 : index
    %c0_39 = arith.constant 0 : index
    %c0_40 = arith.constant 0 : index
    %52 = vector.load %arg1[%c8, %c0_39, %c0_40] : memref<15x16x128xf32, #tpu.memory_space<vmem>>, vector<1x16x128xf32>
    %53 = vector.shape_cast %52 : vector<1x16x128xf32> to vector<16x128xf32>
    %cst_41 = arith.constant dense<0.000000e+00> : vector<8x128xf32>
    %54 = tpu.matmul %19, %53, %cst_41 {dimension_numbers = #tpu.dot_dimension_numbers<[1], [0], [0], [1], [0, 0, 1, 1], [], []>} : vector<8x16xf32>, vector<16x128xf32>, vector<8x128xf32> -> vector<8x128xf32>
    %55 = arith.addf %51, %54 : vector<8x128xf32>
    %c9 = arith.constant 9 : index
    %c0_42 = arith.constant 0 : index
    %c0_43 = arith.constant 0 : index
    %56 = vector.load %arg1[%c9, %c0_42, %c0_43] : memref<15x16x128xf32, #tpu.memory_space<vmem>>, vector<1x16x128xf32>
    %57 = vector.shape_cast %56 : vector<1x16x128xf32> to vector<16x128xf32>
    %cst_44 = arith.constant dense<0.000000e+00> : vector<8x128xf32>
    %58 = tpu.matmul %21, %57, %cst_44 {dimension_numbers = #tpu.dot_dimension_numbers<[1], [0], [0], [1], [0, 0, 1, 1], [], []>} : vector<8x16xf32>, vector<16x128xf32>, vector<8x128xf32> -> vector<8x128xf32>
    %59 = arith.addf %55, %58 : vector<8x128xf32>
    %c10 = arith.constant 10 : index
    %c0_45 = arith.constant 0 : index
    %c0_46 = arith.constant 0 : index
    %60 = vector.load %arg1[%c10, %c0_45, %c0_46] : memref<15x16x128xf32, #tpu.memory_space<vmem>>, vector<1x16x128xf32>
    %61 = vector.shape_cast %60 : vector<1x16x128xf32> to vector<16x128xf32>
    %cst_47 = arith.constant dense<0.000000e+00> : vector<8x128xf32>
    %62 = tpu.matmul %13, %61, %cst_47 {dimension_numbers = #tpu.dot_dimension_numbers<[1], [0], [0], [1], [0, 0, 1, 1], [], []>} : vector<8x16xf32>, vector<16x128xf32>, vector<8x128xf32> -> vector<8x128xf32>
    %c11 = arith.constant 11 : index
    %c0_48 = arith.constant 0 : index
    %c0_49 = arith.constant 0 : index
    %63 = vector.load %arg1[%c11, %c0_48, %c0_49] : memref<15x16x128xf32, #tpu.memory_space<vmem>>, vector<1x16x128xf32>
    %64 = vector.shape_cast %63 : vector<1x16x128xf32> to vector<16x128xf32>
    %cst_50 = arith.constant dense<0.000000e+00> : vector<8x128xf32>
    %65 = tpu.matmul %15, %64, %cst_50 {dimension_numbers = #tpu.dot_dimension_numbers<[1], [0], [0], [1], [0, 0, 1, 1], [], []>} : vector<8x16xf32>, vector<16x128xf32>, vector<8x128xf32> -> vector<8x128xf32>
    %66 = arith.addf %62, %65 : vector<8x128xf32>
    %c12 = arith.constant 12 : index
    %c0_51 = arith.constant 0 : index
    %c0_52 = arith.constant 0 : index
    %67 = vector.load %arg1[%c12, %c0_51, %c0_52] : memref<15x16x128xf32, #tpu.memory_space<vmem>>, vector<1x16x128xf32>
    %68 = vector.shape_cast %67 : vector<1x16x128xf32> to vector<16x128xf32>
    %cst_53 = arith.constant dense<0.000000e+00> : vector<8x128xf32>
    %69 = tpu.matmul %17, %68, %cst_53 {dimension_numbers = #tpu.dot_dimension_numbers<[1], [0], [0], [1], [0, 0, 1, 1], [], []>} : vector<8x16xf32>, vector<16x128xf32>, vector<8x128xf32> -> vector<8x128xf32>
    %70 = arith.addf %66, %69 : vector<8x128xf32>
    %c13 = arith.constant 13 : index
    %c0_54 = arith.constant 0 : index
    %c0_55 = arith.constant 0 : index
    %71 = vector.load %arg1[%c13, %c0_54, %c0_55] : memref<15x16x128xf32, #tpu.memory_space<vmem>>, vector<1x16x128xf32>
    %72 = vector.shape_cast %71 : vector<1x16x128xf32> to vector<16x128xf32>
    %cst_56 = arith.constant dense<0.000000e+00> : vector<8x128xf32>
    %73 = tpu.matmul %19, %72, %cst_56 {dimension_numbers = #tpu.dot_dimension_numbers<[1], [0], [0], [1], [0, 0, 1, 1], [], []>} : vector<8x16xf32>, vector<16x128xf32>, vector<8x128xf32> -> vector<8x128xf32>
    %74 = arith.addf %70, %73 : vector<8x128xf32>
    %c14 = arith.constant 14 : index
    %c0_57 = arith.constant 0 : index
    %c0_58 = arith.constant 0 : index
    %75 = vector.load %arg1[%c14, %c0_57, %c0_58] : memref<15x16x128xf32, #tpu.memory_space<vmem>>, vector<1x16x128xf32>
    %76 = vector.shape_cast %75 : vector<1x16x128xf32> to vector<16x128xf32>
    %cst_59 = arith.constant dense<0.000000e+00> : vector<8x128xf32>
    %77 = tpu.matmul %21, %76, %cst_59 {dimension_numbers = #tpu.dot_dimension_numbers<[1], [0], [0], [1], [0, 0, 1, 1], [], []>} : vector<8x16xf32>, vector<16x128xf32>, vector<8x128xf32> -> vector<8x128xf32>
    %78 = arith.addf %74, %77 : vector<8x128xf32>
    %c0_60 = arith.constant 0 : index
    %c0_61 = arith.constant 0 : index
    %79 = vector.load %arg4[%c0_60, %c0_61] : memref<8x128xf32, #tpu.memory_space<vmem>>, vector<1x128xf32>
    %cst_62 = arith.constant dense<0.000000e+00> : vector<8x128xf32>
    %80 = tpu.matmul %6, %40, %cst_62 {dimension_numbers = #tpu.dot_dimension_numbers<[1], [0], [0], [1], [0, 0, 1, 1], [], []>} : vector<8x8xf32>, vector<8x128xf32>, vector<8x128xf32> -> vector<8x128xf32>
    %81 = arith.addf %80, %59 : vector<8x128xf32>
    %cst_63 = arith.constant dense<0.000000e+00> : vector<8x128xf32>
    %82 = tpu.matmul %11, %78, %cst_63 {dimension_numbers = #tpu.dot_dimension_numbers<[1], [0], [0], [1], [0, 0, 1, 1], [], []>} : vector<8x8xf32>, vector<8x128xf32>, vector<8x128xf32> -> vector<8x128xf32>
    %83 = arith.addf %81, %82 : vector<8x128xf32>
    %84 = vector.broadcast %79 : vector<1x128xf32> to vector<8x128xf32>
    %85 = arith.addf %83, %84 : vector<8x128xf32>
    %cst_64 = arith.constant 0.000000e+00 : f32
    %86 = vector.broadcast %cst_64 : f32 to vector<8x128xf32>
    %87 = arith.maximumf %85, %86 : vector<8x128xf32>
    %c0_65 = arith.constant 0 : index
    %c0_66 = arith.constant 0 : index
    %c0_67 = arith.constant 0 : index
    %88 = vector.load %arg2[%c0_65, %c0_66, %c0_67] : memref<3x128x128xf32, #tpu.memory_space<vmem>>, vector<1x128x128xf32>
    %89 = vector.shape_cast %88 : vector<1x128x128xf32> to vector<128x128xf32>
    %cst_68 = arith.constant dense<0.000000e+00> : vector<8x128xf32>
    %90 = tpu.matmul %87, %89, %cst_68 {dimension_numbers = #tpu.dot_dimension_numbers<[1], [0], [0], [1], [0, 0, 1, 1], [], []>} : vector<8x128xf32>, vector<128x128xf32>, vector<8x128xf32> -> vector<8x128xf32>
    %c1_69 = arith.constant 1 : index
    %c0_70 = arith.constant 0 : index
    %c0_71 = arith.constant 0 : index
    %91 = vector.load %arg2[%c1_69, %c0_70, %c0_71] : memref<3x128x128xf32, #tpu.memory_space<vmem>>, vector<1x128x128xf32>
    %92 = vector.shape_cast %91 : vector<1x128x128xf32> to vector<128x128xf32>
    %cst_72 = arith.constant dense<0.000000e+00> : vector<8x128xf32>
    %93 = tpu.matmul %87, %92, %cst_72 {dimension_numbers = #tpu.dot_dimension_numbers<[1], [0], [0], [1], [0, 0, 1, 1], [], []>} : vector<8x128xf32>, vector<128x128xf32>, vector<8x128xf32> -> vector<8x128xf32>
    %c2_73 = arith.constant 2 : index
    %c0_74 = arith.constant 0 : index
    %c0_75 = arith.constant 0 : index
    %94 = vector.load %arg2[%c2_73, %c0_74, %c0_75] : memref<3x128x128xf32, #tpu.memory_space<vmem>>, vector<1x128x128xf32>
    %95 = vector.shape_cast %94 : vector<1x128x128xf32> to vector<128x128xf32>
    %cst_76 = arith.constant dense<0.000000e+00> : vector<8x128xf32>
    %96 = tpu.matmul %87, %95, %cst_76 {dimension_numbers = #tpu.dot_dimension_numbers<[1], [0], [0], [1], [0, 0, 1, 1], [], []>} : vector<8x128xf32>, vector<128x128xf32>, vector<8x128xf32> -> vector<8x128xf32>
    %c1_77 = arith.constant 1 : index
    %c0_78 = arith.constant 0 : index
    %97 = vector.load %arg4[%c1_77, %c0_78] : memref<8x128xf32, #tpu.memory_space<vmem>>, vector<1x128xf32>
    %cst_79 = arith.constant dense<0.000000e+00> : vector<8x128xf32>
    %98 = tpu.matmul %6, %90, %cst_79 {dimension_numbers = #tpu.dot_dimension_numbers<[1], [0], [0], [1], [0, 0, 1, 1], [], []>} : vector<8x8xf32>, vector<8x128xf32>, vector<8x128xf32> -> vector<8x128xf32>
    %99 = arith.addf %98, %93 : vector<8x128xf32>
    %cst_80 = arith.constant dense<0.000000e+00> : vector<8x128xf32>
    %100 = tpu.matmul %11, %96, %cst_80 {dimension_numbers = #tpu.dot_dimension_numbers<[1], [0], [0], [1], [0, 0, 1, 1], [], []>} : vector<8x8xf32>, vector<8x128xf32>, vector<8x128xf32> -> vector<8x128xf32>
    %101 = arith.addf %99, %100 : vector<8x128xf32>
    %102 = vector.broadcast %97 : vector<1x128xf32> to vector<8x128xf32>
    %103 = arith.addf %101, %102 : vector<8x128xf32>
    %cst_81 = arith.constant 0.000000e+00 : f32
    %104 = vector.broadcast %cst_81 : f32 to vector<8x128xf32>
    %105 = arith.maximumf %103, %104 : vector<8x128xf32>
    %c0_82 = arith.constant 0 : index
    %c0_83 = arith.constant 0 : index
    %c0_84 = arith.constant 0 : index
    %106 = vector.load %arg3[%c0_82, %c0_83, %c0_84] : memref<3x128x128xf32, #tpu.memory_space<vmem>>, vector<1x128x128xf32>
    %107 = vector.shape_cast %106 : vector<1x128x128xf32> to vector<128x128xf32>
    %cst_85 = arith.constant dense<0.000000e+00> : vector<8x128xf32>
    %108 = tpu.matmul %105, %107, %cst_85 {dimension_numbers = #tpu.dot_dimension_numbers<[1], [0], [0], [1], [0, 0, 1, 1], [], []>} : vector<8x128xf32>, vector<128x128xf32>, vector<8x128xf32> -> vector<8x128xf32>
    %c1_86 = arith.constant 1 : index
    %c0_87 = arith.constant 0 : index
    %c0_88 = arith.constant 0 : index
    %109 = vector.load %arg3[%c1_86, %c0_87, %c0_88] : memref<3x128x128xf32, #tpu.memory_space<vmem>>, vector<1x128x128xf32>
    %110 = vector.shape_cast %109 : vector<1x128x128xf32> to vector<128x128xf32>
    %cst_89 = arith.constant dense<0.000000e+00> : vector<8x128xf32>
    %111 = tpu.matmul %105, %110, %cst_89 {dimension_numbers = #tpu.dot_dimension_numbers<[1], [0], [0], [1], [0, 0, 1, 1], [], []>} : vector<8x128xf32>, vector<128x128xf32>, vector<8x128xf32> -> vector<8x128xf32>
    %c2_90 = arith.constant 2 : index
    %c0_91 = arith.constant 0 : index
    %c0_92 = arith.constant 0 : index
    %112 = vector.load %arg3[%c2_90, %c0_91, %c0_92] : memref<3x128x128xf32, #tpu.memory_space<vmem>>, vector<1x128x128xf32>
    %113 = vector.shape_cast %112 : vector<1x128x128xf32> to vector<128x128xf32>
    %cst_93 = arith.constant dense<0.000000e+00> : vector<8x128xf32>
    %114 = tpu.matmul %105, %113, %cst_93 {dimension_numbers = #tpu.dot_dimension_numbers<[1], [0], [0], [1], [0, 0, 1, 1], [], []>} : vector<8x128xf32>, vector<128x128xf32>, vector<8x128xf32> -> vector<8x128xf32>
    %c2_94 = arith.constant 2 : index
    %c0_95 = arith.constant 0 : index
    %115 = vector.load %arg4[%c2_94, %c0_95] : memref<8x128xf32, #tpu.memory_space<vmem>>, vector<1x128xf32>
    %cst_96 = arith.constant dense<0.000000e+00> : vector<8x128xf32>
    %116 = tpu.matmul %6, %108, %cst_96 {dimension_numbers = #tpu.dot_dimension_numbers<[1], [0], [0], [1], [0, 0, 1, 1], [], []>} : vector<8x8xf32>, vector<8x128xf32>, vector<8x128xf32> -> vector<8x128xf32>
    %117 = arith.addf %116, %111 : vector<8x128xf32>
    %cst_97 = arith.constant dense<0.000000e+00> : vector<8x128xf32>
    %118 = tpu.matmul %11, %114, %cst_97 {dimension_numbers = #tpu.dot_dimension_numbers<[1], [0], [0], [1], [0, 0, 1, 1], [], []>} : vector<8x8xf32>, vector<8x128xf32>, vector<8x128xf32> -> vector<8x128xf32>
    %119 = arith.addf %117, %118 : vector<8x128xf32>
    %120 = vector.broadcast %115 : vector<1x128xf32> to vector<8x128xf32>
    %121 = arith.addf %119, %120 : vector<8x128xf32>
    %122 = tpu.iota {dimensions = array<i32: 1>} : vector<8x128xi32>
    %c5_i32 = arith.constant 5 : i32
    %123 = vector.broadcast %c5_i32 : i32 to vector<8x128xi32>
    %124 = arith.cmpi slt, %122, %123 : vector<8x128xi32>
    %125 = arith.negf %121 : vector<8x128xf32>
    %126 = math.exp %125 : vector<8x128xf32>
    %cst_98 = arith.constant 1.000000e+00 : f32
    %127 = vector.broadcast %cst_98 : f32 to vector<8x128xf32>
    %128 = arith.addf %127, %126 : vector<8x128xf32>
    %129 = arith.divf %127, %128 : vector<8x128xf32>
    %cst_99 = arith.constant 0.000000e+00 : f32
    %130 = vector.broadcast %cst_99 : f32 to vector<8x128xf32>
    %131 = arith.select %124, %129, %130 : vector<8x128xi1>, vector<8x128xf32>
    %cst_100 = arith.constant dense<0.000000e+00> : vector<8xf32>
    %132 = vector.multi_reduction <add>, %131, %cst_100 [1] : vector<8x128xf32> to vector<8xf32>
    %133 = vector.shape_cast %132 : vector<8xf32> to vector<8x1xf32>
    %cst_101 = arith.constant 5.000000e+00 : f32
    %134 = vector.broadcast %cst_101 : f32 to vector<8x1xf32>
    %135 = arith.divf %133, %134 : vector<8x1xf32>
    %cst_102 = arith.constant 0xFF800000 : f32
    %136 = vector.broadcast %cst_102 : f32 to vector<8x128xf32>
    %137 = arith.select %124, %121, %136 : vector<8x128xi1>, vector<8x128xf32>
    %cst_103 = arith.constant dense<0xFF800000> : vector<8xf32>
    %138 = vector.multi_reduction <maximumf>, %137, %cst_103 [1] : vector<8x128xf32> to vector<8xf32>
    %139 = vector.shape_cast %138 : vector<8xf32> to vector<8x1xf32>
    %140 = vector.broadcast %139 : vector<8x1xf32> to vector<8x128xf32>
    %141 = arith.cmpf oeq, %137, %140 : vector<8x128xf32>
    %c128_i32 = arith.constant 128 : i32
    %142 = vector.broadcast %c128_i32 : i32 to vector<8x128xi32>
    %143 = arith.select %141, %122, %142 : vector<8x128xi1>, vector<8x128xi32>
    %cst_104 = arith.constant dense<2147483647> : vector<8xi32>
    %144 = vector.multi_reduction <minsi>, %143, %cst_104 [1] : vector<8x128xi32> to vector<8xi32>
    %145 = vector.shape_cast %144 : vector<8xi32> to vector<8x1xi32>
    %146 = vector.broadcast %145 : vector<8x1xi32> to vector<8x128xi32>
    %147 = arith.cmpi eq, %122, %146 : vector<8x128xi32>
    %148 = arith.extui %147 : vector<8x128xi1> to vector<8x128xi32>
    %149 = arith.sitofp %148 : vector<8x128xi32> to vector<8x128xf32>
    %c8_i32 = arith.constant 8 : i32
    %150 = vector.broadcast %c8_i32 : i32 to vector<8x128xi32>
    %151 = arith.cmpi eq, %122, %150 : vector<8x128xi32>
    %cst_105 = arith.constant 0.000000e+00 : f32
    %152 = vector.shape_cast %135 : vector<8x1xf32> to vector<8x1xf32>
    %153 = vector.broadcast %152 : vector<8x1xf32> to vector<8x128xf32>
    %154 = vector.broadcast %cst_105 : f32 to vector<8x128xf32>
    %155 = arith.select %151, %153, %154 : vector<8x128xi1>, vector<8x128xf32>
    %156 = arith.addf %149, %155 : vector<8x128xf32>
    %c0_106 = arith.constant 0 : index
    %c0_107 = arith.constant 0 : index
    %157 = vector.load %arg5[%c0_106, %c0_107] : memref<8x128xf32, #tpu.memory_space<vmem>>, vector<8x128xf32>
    tpu.vector_store %arg5[%c0_106, %c0_107], %156 {strides = array<i32>} : memref<8x128xf32, #tpu.memory_space<vmem>>, vector<8x128xf32>,
    return
  }
}

module attributes {stable_mosaic.version = 11 : i64} {
  func.func @gcn_kernel(%arg0: i32, %arg1: memref<1x8x16xf32, #tpu.memory_space<vmem>>, %arg2: memref<1x16x16xf32, #tpu.memory_space<vmem>>, %arg3: memref<1x16x8xf32, #tpu.memory_space<vmem>>, %arg4: memref<1x8x16xf32, #tpu.memory_space<vmem>>, %arg5: memref<1x4x80x16xf32, #tpu.memory_space<vmem>>, %arg6: memref<1x8x16xf32, #tpu.memory_space<vmem>>) attributes {dimension_semantics = [#tpu.dimension_semantics<parallel>], iteration_bounds = array<i64: 5>, scalar_prefetch = 0 : i64, scratch_operands = 0 : i64, tpu.core_type = #tpu.core_type<tc>, window_params = [{transform_indices = @transform_0, window_bounds = array<i64: 1, 8, 16>}, {transform_indices = @transform_1, window_bounds = array<i64: 1, 16, 16>}, {transform_indices = @transform_2, window_bounds = array<i64: 1, 16, 8>}, {transform_indices = @transform_3, window_bounds = array<i64: 1, 8, 16>}, {transform_indices = @transform_4, window_bounds = array<i64: 1, 4, 80, 16>}, {transform_indices = @transform_5, window_bounds = array<i64: 1, 8, 16>}]} {
    %c0 = arith.constant 0 : index
    %c0_0 = arith.constant 0 : index
    %c0_1 = arith.constant 0 : index
    %0 = vector.load %arg1[%c0, %c0_0, %c0_1] : memref<1x8x16xf32, #tpu.memory_space<vmem>>, vector<1x8x16xf32>
    %1 = vector.shape_cast %0 : vector<1x8x16xf32> to vector<8x16xf32>
    %c0_2 = arith.constant 0 : index
    %c0_3 = arith.constant 0 : index
    %c0_4 = arith.constant 0 : index
    %2 = vector.load %arg2[%c0_2, %c0_3, %c0_4] : memref<1x16x16xf32, #tpu.memory_space<vmem>>, vector<1x16x16xf32>
    %3 = vector.shape_cast %2 : vector<1x16x16xf32> to vector<16x16xf32>
    %c0_5 = arith.constant 0 : index
    %c0_6 = arith.constant 0 : index
    %c0_7 = arith.constant 0 : index
    %4 = vector.load %arg3[%c0_5, %c0_6, %c0_7] : memref<1x16x8xf32, #tpu.memory_space<vmem>>, vector<1x16x8xf32>
    %5 = vector.shape_cast %4 : vector<1x16x8xf32> to vector<16x8xf32>
    %c0_8 = arith.constant 0 : index
    %c0_9 = arith.constant 0 : index
    %c0_10 = arith.constant 0 : index
    %6 = vector.load %arg4[%c0_8, %c0_9, %c0_10] : memref<1x8x16xf32, #tpu.memory_space<vmem>>, vector<1x8x16xf32>
    %7 = vector.shape_cast %6 : vector<1x8x16xf32> to vector<8x16xf32>
    %c0_11 = arith.constant 0 : index
    %c0_12 = arith.constant 0 : index
    %c0_13 = arith.constant 0 : index
    %c0_14 = arith.constant 0 : index
    %8 = vector.load %arg5[%c0_11, %c0_12, %c0_13, %c0_14] : memref<1x4x80x16xf32, #tpu.memory_space<vmem>>, vector<1x1x80x16xf32>
    %9 = vector.shape_cast %8 : vector<1x1x80x16xf32> to vector<80x16xf32>
    %10 = vector.extract_strided_slice %9 {offsets = [0, 0], sizes = [16, 16], strides = [1, 1]} : vector<80x16xf32> to vector<16x16xf32>
    %11 = vector.extract_strided_slice %9 {offsets = [16, 0], sizes = [16, 16], strides = [1, 1]} : vector<80x16xf32> to vector<16x16xf32>
    %12 = vector.extract_strided_slice %9 {offsets = [32, 0], sizes = [16, 16], strides = [1, 1]} : vector<80x16xf32> to vector<16x16xf32>
    %13 = vector.extract_strided_slice %9 {offsets = [48, 0], sizes = [16, 16], strides = [1, 1]} : vector<80x16xf32> to vector<16x16xf32>
    %14 = vector.extract_strided_slice %9 {offsets = [64, 0], sizes = [1, 16], strides = [1, 1]} : vector<80x16xf32> to vector<1x16xf32>
    %15 = vector.extract_strided_slice %9 {offsets = [65, 0], sizes = [1, 16], strides = [1, 1]} : vector<80x16xf32> to vector<1x16xf32>
    %16 = vector.extract_strided_slice %9 {offsets = [66, 0], sizes = [1, 16], strides = [1, 1]} : vector<80x16xf32> to vector<1x16xf32>
    %17 = vector.extract_strided_slice %9 {offsets = [67, 0], sizes = [1, 16], strides = [1, 1]} : vector<80x16xf32> to vector<1x16xf32>
    %18 = vector.extract_strided_slice %9 {offsets = [68, 0], sizes = [1, 16], strides = [1, 1]} : vector<80x16xf32> to vector<1x16xf32>
    %19 = vector.extract_strided_slice %9 {offsets = [69, 0], sizes = [1, 16], strides = [1, 1]} : vector<80x16xf32> to vector<1x16xf32>
    %20 = vector.extract_strided_slice %9 {offsets = [70, 0], sizes = [1, 16], strides = [1, 1]} : vector<80x16xf32> to vector<1x16xf32>
    %21 = vector.extract_strided_slice %9 {offsets = [71, 0], sizes = [1, 16], strides = [1, 1]} : vector<80x16xf32> to vector<1x16xf32>
    %22 = vector.extract_strided_slice %9 {offsets = [72, 0], sizes = [1, 16], strides = [1, 1]} : vector<80x16xf32> to vector<1x16xf32>
    %23 = vector.extract_strided_slice %9 {offsets = [73, 0], sizes = [1, 16], strides = [1, 1]} : vector<80x16xf32> to vector<1x16xf32>
    %cst = arith.constant dense<0.000000e+00> : vector<16x16xf32>
    %24 = tpu.matmul %5, %1, %cst {dimension_numbers = #tpu.dot_dimension_numbers<[1], [0], [0], [1], [0, 0, 1, 1], [], []>} : vector<16x8xf32>, vector<8x16xf32>, vector<16x16xf32> -> vector<16x16xf32>
    %25 = vector.broadcast %14 : vector<1x16xf32> to vector<16x16xf32>
    %26 = arith.mulf %3, %25 : vector<16x16xf32>
    %27 = vector.broadcast %15 : vector<1x16xf32> to vector<16x16xf32>
    %28 = arith.addf %26, %27 : vector<16x16xf32>
    %cst_15 = arith.constant dense<0.000000e+00> : vector<16x16xf32>
    %29 = tpu.matmul %28, %10, %cst_15 {dimension_numbers = #tpu.dot_dimension_numbers<[1], [0], [0], [1], [0, 0, 1, 1], [], []>} : vector<16x16xf32>, vector<16x16xf32>, vector<16x16xf32> -> vector<16x16xf32>
    %30 = vector.broadcast %16 : vector<1x16xf32> to vector<16x16xf32>
    %31 = arith.mulf %24, %30 : vector<16x16xf32>
    %32 = vector.broadcast %17 : vector<1x16xf32> to vector<16x16xf32>
    %33 = arith.addf %31, %32 : vector<16x16xf32>
    %cst_16 = arith.constant dense<0.000000e+00> : vector<16x16xf32>
    %34 = tpu.matmul %33, %11, %cst_16 {dimension_numbers = #tpu.dot_dimension_numbers<[1], [0], [0], [1], [0, 0, 1, 1], [], []>} : vector<16x16xf32>, vector<16x16xf32>, vector<16x16xf32> -> vector<16x16xf32>
    %35 = arith.addf %29, %34 : vector<16x16xf32>
    %36 = vector.broadcast %22 : vector<1x16xf32> to vector<16x16xf32>
    %37 = arith.addf %35, %36 : vector<16x16xf32>
    %cst_17 = arith.constant 0.000000e+00 : f32
    %38 = vector.broadcast %cst_17 : f32 to vector<16x16xf32>
    %39 = arith.maximumf %37, %38 : vector<16x16xf32>
    %cst_18 = arith.constant dense<0.000000e+00> : vector<8x16xf32>
    %40 = tpu.matmul %7, %39, %cst_18 {dimension_numbers = #tpu.dot_dimension_numbers<[1], [0], [0], [1], [0, 0, 1, 1], [], []>} : vector<8x16xf32>, vector<16x16xf32>, vector<8x16xf32> -> vector<8x16xf32>
    %41 = vector.broadcast %18 : vector<1x16xf32> to vector<8x16xf32>
    %42 = arith.mulf %40, %41 : vector<8x16xf32>
    %43 = vector.broadcast %19 : vector<1x16xf32> to vector<8x16xf32>
    %44 = arith.addf %42, %43 : vector<8x16xf32>
    %cst_19 = arith.constant dense<0.000000e+00> : vector<8x16xf32>
    %45 = tpu.matmul %44, %12, %cst_19 {dimension_numbers = #tpu.dot_dimension_numbers<[1], [0], [0], [1], [0, 0, 1, 1], [], []>} : vector<8x16xf32>, vector<16x16xf32>, vector<8x16xf32> -> vector<8x16xf32>
    %46 = vector.broadcast %20 : vector<1x16xf32> to vector<8x16xf32>
    %47 = arith.mulf %1, %46 : vector<8x16xf32>
    %48 = vector.broadcast %21 : vector<1x16xf32> to vector<8x16xf32>
    %49 = arith.addf %47, %48 : vector<8x16xf32>
    %cst_20 = arith.constant dense<0.000000e+00> : vector<8x16xf32>
    %50 = tpu.matmul %49, %13, %cst_20 {dimension_numbers = #tpu.dot_dimension_numbers<[1], [0], [0], [1], [0, 0, 1, 1], [], []>} : vector<8x16xf32>, vector<16x16xf32>, vector<8x16xf32> -> vector<8x16xf32>
    %51 = arith.addf %45, %50 : vector<8x16xf32>
    %52 = vector.broadcast %23 : vector<1x16xf32> to vector<8x16xf32>
    %53 = arith.addf %51, %52 : vector<8x16xf32>
    %cst_21 = arith.constant 0.000000e+00 : f32
    %54 = vector.broadcast %cst_21 : f32 to vector<8x16xf32>
    %55 = arith.maximumf %53, %54 : vector<8x16xf32>
    %c0_22 = arith.constant 0 : index
    %c1 = arith.constant 1 : index
    %c0_23 = arith.constant 0 : index
    %c0_24 = arith.constant 0 : index
    %56 = vector.load %arg5[%c0_22, %c1, %c0_23, %c0_24] : memref<1x4x80x16xf32, #tpu.memory_space<vmem>>, vector<1x1x80x16xf32>
    %57 = vector.shape_cast %56 : vector<1x1x80x16xf32> to vector<80x16xf32>
    %58 = vector.extract_strided_slice %57 {offsets = [0, 0], sizes = [16, 16], strides = [1, 1]} : vector<80x16xf32> to vector<16x16xf32>
    %59 = vector.extract_strided_slice %57 {offsets = [16, 0], sizes = [16, 16], strides = [1, 1]} : vector<80x16xf32> to vector<16x16xf32>
    %60 = vector.extract_strided_slice %57 {offsets = [32, 0], sizes = [16, 16], strides = [1, 1]} : vector<80x16xf32> to vector<16x16xf32>
    %61 = vector.extract_strided_slice %57 {offsets = [48, 0], sizes = [16, 16], strides = [1, 1]} : vector<80x16xf32> to vector<16x16xf32>
    %62 = vector.extract_strided_slice %57 {offsets = [64, 0], sizes = [1, 16], strides = [1, 1]} : vector<80x16xf32> to vector<1x16xf32>
    %63 = vector.extract_strided_slice %57 {offsets = [65, 0], sizes = [1, 16], strides = [1, 1]} : vector<80x16xf32> to vector<1x16xf32>
    %64 = vector.extract_strided_slice %57 {offsets = [66, 0], sizes = [1, 16], strides = [1, 1]} : vector<80x16xf32> to vector<1x16xf32>
    %65 = vector.extract_strided_slice %57 {offsets = [67, 0], sizes = [1, 16], strides = [1, 1]} : vector<80x16xf32> to vector<1x16xf32>
    %66 = vector.extract_strided_slice %57 {offsets = [68, 0], sizes = [1, 16], strides = [1, 1]} : vector<80x16xf32> to vector<1x16xf32>
    %67 = vector.extract_strided_slice %57 {offsets = [69, 0], sizes = [1, 16], strides = [1, 1]} : vector<80x16xf32> to vector<1x16xf32>
    %68 = vector.extract_strided_slice %57 {offsets = [70, 0], sizes = [1, 16], strides = [1, 1]} : vector<80x16xf32> to vector<1x16xf32>
    %69 = vector.extract_strided_slice %57 {offsets = [71, 0], sizes = [1, 16], strides = [1, 1]} : vector<80x16xf32> to vector<1x16xf32>
    %70 = vector.extract_strided_slice %57 {offsets = [72, 0], sizes = [1, 16], strides = [1, 1]} : vector<80x16xf32> to vector<1x16xf32>
    %71 = vector.extract_strided_slice %57 {offsets = [73, 0], sizes = [1, 16], strides = [1, 1]} : vector<80x16xf32> to vector<1x16xf32>
    %cst_25 = arith.constant dense<0.000000e+00> : vector<16x16xf32>
    %72 = tpu.matmul %5, %55, %cst_25 {dimension_numbers = #tpu.dot_dimension_numbers<[1], [0], [0], [1], [0, 0, 1, 1], [], []>} : vector<16x8xf32>, vector<8x16xf32>, vector<16x16xf32> -> vector<16x16xf32>
    %73 = vector.broadcast %62 : vector<1x16xf32> to vector<16x16xf32>
    %74 = arith.mulf %3, %73 : vector<16x16xf32>
    %75 = vector.broadcast %63 : vector<1x16xf32> to vector<16x16xf32>
    %76 = arith.addf %74, %75 : vector<16x16xf32>
    %cst_26 = arith.constant dense<0.000000e+00> : vector<16x16xf32>
    %77 = tpu.matmul %76, %58, %cst_26 {dimension_numbers = #tpu.dot_dimension_numbers<[1], [0], [0], [1], [0, 0, 1, 1], [], []>} : vector<16x16xf32>, vector<16x16xf32>, vector<16x16xf32> -> vector<16x16xf32>
    %78 = vector.broadcast %64 : vector<1x16xf32> to vector<16x16xf32>
    %79 = arith.mulf %72, %78 : vector<16x16xf32>
    %80 = vector.broadcast %65 : vector<1x16xf32> to vector<16x16xf32>
    %81 = arith.addf %79, %80 : vector<16x16xf32>
    %cst_27 = arith.constant dense<0.000000e+00> : vector<16x16xf32>
    %82 = tpu.matmul %81, %59, %cst_27 {dimension_numbers = #tpu.dot_dimension_numbers<[1], [0], [0], [1], [0, 0, 1, 1], [], []>} : vector<16x16xf32>, vector<16x16xf32>, vector<16x16xf32> -> vector<16x16xf32>
    %83 = arith.addf %77, %82 : vector<16x16xf32>
    %84 = vector.broadcast %70 : vector<1x16xf32> to vector<16x16xf32>
    %85 = arith.addf %83, %84 : vector<16x16xf32>
    %cst_28 = arith.constant 0.000000e+00 : f32
    %86 = vector.broadcast %cst_28 : f32 to vector<16x16xf32>
    %87 = arith.maximumf %85, %86 : vector<16x16xf32>
    %cst_29 = arith.constant dense<0.000000e+00> : vector<8x16xf32>
    %88 = tpu.matmul %7, %87, %cst_29 {dimension_numbers = #tpu.dot_dimension_numbers<[1], [0], [0], [1], [0, 0, 1, 1], [], []>} : vector<8x16xf32>, vector<16x16xf32>, vector<8x16xf32> -> vector<8x16xf32>
    %89 = vector.broadcast %66 : vector<1x16xf32> to vector<8x16xf32>
    %90 = arith.mulf %88, %89 : vector<8x16xf32>
    %91 = vector.broadcast %67 : vector<1x16xf32> to vector<8x16xf32>
    %92 = arith.addf %90, %91 : vector<8x16xf32>
    %cst_30 = arith.constant dense<0.000000e+00> : vector<8x16xf32>
    %93 = tpu.matmul %92, %60, %cst_30 {dimension_numbers = #tpu.dot_dimension_numbers<[1], [0], [0], [1], [0, 0, 1, 1], [], []>} : vector<8x16xf32>, vector<16x16xf32>, vector<8x16xf32> -> vector<8x16xf32>
    %94 = vector.broadcast %68 : vector<1x16xf32> to vector<8x16xf32>
    %95 = arith.mulf %55, %94 : vector<8x16xf32>
    %96 = vector.broadcast %69 : vector<1x16xf32> to vector<8x16xf32>
    %97 = arith.addf %95, %96 : vector<8x16xf32>
    %cst_31 = arith.constant dense<0.000000e+00> : vector<8x16xf32>
    %98 = tpu.matmul %97, %61, %cst_31 {dimension_numbers = #tpu.dot_dimension_numbers<[1], [0], [0], [1], [0, 0, 1, 1], [], []>} : vector<8x16xf32>, vector<16x16xf32>, vector<8x16xf32> -> vector<8x16xf32>
    %99 = arith.addf %93, %98 : vector<8x16xf32>
    %100 = vector.broadcast %71 : vector<1x16xf32> to vector<8x16xf32>
    %101 = arith.addf %99, %100 : vector<8x16xf32>
    %cst_32 = arith.constant 0.000000e+00 : f32
    %102 = vector.broadcast %cst_32 : f32 to vector<8x16xf32>
    %103 = arith.maximumf %101, %102 : vector<8x16xf32>
    %c0_33 = arith.constant 0 : index
    %c2 = arith.constant 2 : index
    %c0_34 = arith.constant 0 : index
    %c0_35 = arith.constant 0 : index
    %104 = vector.load %arg5[%c0_33, %c2, %c0_34, %c0_35] : memref<1x4x80x16xf32, #tpu.memory_space<vmem>>, vector<1x1x80x16xf32>
    %105 = vector.shape_cast %104 : vector<1x1x80x16xf32> to vector<80x16xf32>
    %106 = vector.extract_strided_slice %105 {offsets = [0, 0], sizes = [16, 16], strides = [1, 1]} : vector<80x16xf32> to vector<16x16xf32>
    %107 = vector.extract_strided_slice %105 {offsets = [16, 0], sizes = [16, 16], strides = [1, 1]} : vector<80x16xf32> to vector<16x16xf32>
    %108 = vector.extract_strided_slice %105 {offsets = [32, 0], sizes = [16, 16], strides = [1, 1]} : vector<80x16xf32> to vector<16x16xf32>
    %109 = vector.extract_strided_slice %105 {offsets = [48, 0], sizes = [16, 16], strides = [1, 1]} : vector<80x16xf32> to vector<16x16xf32>
    %110 = vector.extract_strided_slice %105 {offsets = [64, 0], sizes = [1, 16], strides = [1, 1]} : vector<80x16xf32> to vector<1x16xf32>
    %111 = vector.extract_strided_slice %105 {offsets = [65, 0], sizes = [1, 16], strides = [1, 1]} : vector<80x16xf32> to vector<1x16xf32>
    %112 = vector.extract_strided_slice %105 {offsets = [66, 0], sizes = [1, 16], strides = [1, 1]} : vector<80x16xf32> to vector<1x16xf32>
    %113 = vector.extract_strided_slice %105 {offsets = [67, 0], sizes = [1, 16], strides = [1, 1]} : vector<80x16xf32> to vector<1x16xf32>
    %114 = vector.extract_strided_slice %105 {offsets = [68, 0], sizes = [1, 16], strides = [1, 1]} : vector<80x16xf32> to vector<1x16xf32>
    %115 = vector.extract_strided_slice %105 {offsets = [69, 0], sizes = [1, 16], strides = [1, 1]} : vector<80x16xf32> to vector<1x16xf32>
    %116 = vector.extract_strided_slice %105 {offsets = [70, 0], sizes = [1, 16], strides = [1, 1]} : vector<80x16xf32> to vector<1x16xf32>
    %117 = vector.extract_strided_slice %105 {offsets = [71, 0], sizes = [1, 16], strides = [1, 1]} : vector<80x16xf32> to vector<1x16xf32>
    %118 = vector.extract_strided_slice %105 {offsets = [72, 0], sizes = [1, 16], strides = [1, 1]} : vector<80x16xf32> to vector<1x16xf32>
    %119 = vector.extract_strided_slice %105 {offsets = [73, 0], sizes = [1, 16], strides = [1, 1]} : vector<80x16xf32> to vector<1x16xf32>
    %cst_36 = arith.constant dense<0.000000e+00> : vector<16x16xf32>
    %120 = tpu.matmul %5, %103, %cst_36 {dimension_numbers = #tpu.dot_dimension_numbers<[1], [0], [0], [1], [0, 0, 1, 1], [], []>} : vector<16x8xf32>, vector<8x16xf32>, vector<16x16xf32> -> vector<16x16xf32>
    %121 = vector.broadcast %110 : vector<1x16xf32> to vector<16x16xf32>
    %122 = arith.mulf %3, %121 : vector<16x16xf32>
    %123 = vector.broadcast %111 : vector<1x16xf32> to vector<16x16xf32>
    %124 = arith.addf %122, %123 : vector<16x16xf32>
    %cst_37 = arith.constant dense<0.000000e+00> : vector<16x16xf32>
    %125 = tpu.matmul %124, %106, %cst_37 {dimension_numbers = #tpu.dot_dimension_numbers<[1], [0], [0], [1], [0, 0, 1, 1], [], []>} : vector<16x16xf32>, vector<16x16xf32>, vector<16x16xf32> -> vector<16x16xf32>
    %126 = vector.broadcast %112 : vector<1x16xf32> to vector<16x16xf32>
    %127 = arith.mulf %120, %126 : vector<16x16xf32>
    %128 = vector.broadcast %113 : vector<1x16xf32> to vector<16x16xf32>
    %129 = arith.addf %127, %128 : vector<16x16xf32>
    %cst_38 = arith.constant dense<0.000000e+00> : vector<16x16xf32>
    %130 = tpu.matmul %129, %107, %cst_38 {dimension_numbers = #tpu.dot_dimension_numbers<[1], [0], [0], [1], [0, 0, 1, 1], [], []>} : vector<16x16xf32>, vector<16x16xf32>, vector<16x16xf32> -> vector<16x16xf32>
    %131 = arith.addf %125, %130 : vector<16x16xf32>
    %132 = vector.broadcast %118 : vector<1x16xf32> to vector<16x16xf32>
    %133 = arith.addf %131, %132 : vector<16x16xf32>
    %cst_39 = arith.constant 0.000000e+00 : f32
    %134 = vector.broadcast %cst_39 : f32 to vector<16x16xf32>
    %135 = arith.maximumf %133, %134 : vector<16x16xf32>
    %cst_40 = arith.constant dense<0.000000e+00> : vector<8x16xf32>
    %136 = tpu.matmul %7, %135, %cst_40 {dimension_numbers = #tpu.dot_dimension_numbers<[1], [0], [0], [1], [0, 0, 1, 1], [], []>} : vector<8x16xf32>, vector<16x16xf32>, vector<8x16xf32> -> vector<8x16xf32>
    %137 = vector.broadcast %114 : vector<1x16xf32> to vector<8x16xf32>
    %138 = arith.mulf %136, %137 : vector<8x16xf32>
    %139 = vector.broadcast %115 : vector<1x16xf32> to vector<8x16xf32>
    %140 = arith.addf %138, %139 : vector<8x16xf32>
    %cst_41 = arith.constant dense<0.000000e+00> : vector<8x16xf32>
    %141 = tpu.matmul %140, %108, %cst_41 {dimension_numbers = #tpu.dot_dimension_numbers<[1], [0], [0], [1], [0, 0, 1, 1], [], []>} : vector<8x16xf32>, vector<16x16xf32>, vector<8x16xf32> -> vector<8x16xf32>
    %142 = vector.broadcast %116 : vector<1x16xf32> to vector<8x16xf32>
    %143 = arith.mulf %103, %142 : vector<8x16xf32>
    %144 = vector.broadcast %117 : vector<1x16xf32> to vector<8x16xf32>
    %145 = arith.addf %143, %144 : vector<8x16xf32>
    %cst_42 = arith.constant dense<0.000000e+00> : vector<8x16xf32>
    %146 = tpu.matmul %145, %109, %cst_42 {dimension_numbers = #tpu.dot_dimension_numbers<[1], [0], [0], [1], [0, 0, 1, 1], [], []>} : vector<8x16xf32>, vector<16x16xf32>, vector<8x16xf32> -> vector<8x16xf32>
    %147 = arith.addf %141, %146 : vector<8x16xf32>
    %148 = vector.broadcast %119 : vector<1x16xf32> to vector<8x16xf32>
    %149 = arith.addf %147, %148 : vector<8x16xf32>
    %cst_43 = arith.constant 0.000000e+00 : f32
    %150 = vector.broadcast %cst_43 : f32 to vector<8x16xf32>
    %151 = arith.maximumf %149, %150 : vector<8x16xf32>
    %c0_44 = arith.constant 0 : index
    %c3 = arith.constant 3 : index
    %c0_45 = arith.constant 0 : index
    %c0_46 = arith.constant 0 : index
    %152 = vector.load %arg5[%c0_44, %c3, %c0_45, %c0_46] : memref<1x4x80x16xf32, #tpu.memory_space<vmem>>, vector<1x1x80x16xf32>
    %153 = vector.shape_cast %152 : vector<1x1x80x16xf32> to vector<80x16xf32>
    %154 = vector.extract_strided_slice %153 {offsets = [0, 0], sizes = [16, 16], strides = [1, 1]} : vector<80x16xf32> to vector<16x16xf32>
    %155 = vector.extract_strided_slice %153 {offsets = [16, 0], sizes = [16, 16], strides = [1, 1]} : vector<80x16xf32> to vector<16x16xf32>
    %156 = vector.extract_strided_slice %153 {offsets = [32, 0], sizes = [16, 16], strides = [1, 1]} : vector<80x16xf32> to vector<16x16xf32>
    %157 = vector.extract_strided_slice %153 {offsets = [48, 0], sizes = [16, 16], strides = [1, 1]} : vector<80x16xf32> to vector<16x16xf32>
    %158 = vector.extract_strided_slice %153 {offsets = [64, 0], sizes = [1, 16], strides = [1, 1]} : vector<80x16xf32> to vector<1x16xf32>
    %159 = vector.extract_strided_slice %153 {offsets = [65, 0], sizes = [1, 16], strides = [1, 1]} : vector<80x16xf32> to vector<1x16xf32>
    %160 = vector.extract_strided_slice %153 {offsets = [66, 0], sizes = [1, 16], strides = [1, 1]} : vector<80x16xf32> to vector<1x16xf32>
    %161 = vector.extract_strided_slice %153 {offsets = [67, 0], sizes = [1, 16], strides = [1, 1]} : vector<80x16xf32> to vector<1x16xf32>
    %162 = vector.extract_strided_slice %153 {offsets = [68, 0], sizes = [1, 16], strides = [1, 1]} : vector<80x16xf32> to vector<1x16xf32>
    %163 = vector.extract_strided_slice %153 {offsets = [69, 0], sizes = [1, 16], strides = [1, 1]} : vector<80x16xf32> to vector<1x16xf32>
    %164 = vector.extract_strided_slice %153 {offsets = [70, 0], sizes = [1, 16], strides = [1, 1]} : vector<80x16xf32> to vector<1x16xf32>
    %165 = vector.extract_strided_slice %153 {offsets = [71, 0], sizes = [1, 16], strides = [1, 1]} : vector<80x16xf32> to vector<1x16xf32>
    %166 = vector.extract_strided_slice %153 {offsets = [72, 0], sizes = [1, 16], strides = [1, 1]} : vector<80x16xf32> to vector<1x16xf32>
    %167 = vector.extract_strided_slice %153 {offsets = [73, 0], sizes = [1, 16], strides = [1, 1]} : vector<80x16xf32> to vector<1x16xf32>
    %cst_47 = arith.constant dense<0.000000e+00> : vector<16x16xf32>
    %168 = tpu.matmul %5, %151, %cst_47 {dimension_numbers = #tpu.dot_dimension_numbers<[1], [0], [0], [1], [0, 0, 1, 1], [], []>} : vector<16x8xf32>, vector<8x16xf32>, vector<16x16xf32> -> vector<16x16xf32>
    %169 = vector.broadcast %158 : vector<1x16xf32> to vector<16x16xf32>
    %170 = arith.mulf %3, %169 : vector<16x16xf32>
    %171 = vector.broadcast %159 : vector<1x16xf32> to vector<16x16xf32>
    %172 = arith.addf %170, %171 : vector<16x16xf32>
    %cst_48 = arith.constant dense<0.000000e+00> : vector<16x16xf32>
    %173 = tpu.matmul %172, %154, %cst_48 {dimension_numbers = #tpu.dot_dimension_numbers<[1], [0], [0], [1], [0, 0, 1, 1], [], []>} : vector<16x16xf32>, vector<16x16xf32>, vector<16x16xf32> -> vector<16x16xf32>
    %174 = vector.broadcast %160 : vector<1x16xf32> to vector<16x16xf32>
    %175 = arith.mulf %168, %174 : vector<16x16xf32>
    %176 = vector.broadcast %161 : vector<1x16xf32> to vector<16x16xf32>
    %177 = arith.addf %175, %176 : vector<16x16xf32>
    %cst_49 = arith.constant dense<0.000000e+00> : vector<16x16xf32>
    %178 = tpu.matmul %177, %155, %cst_49 {dimension_numbers = #tpu.dot_dimension_numbers<[1], [0], [0], [1], [0, 0, 1, 1], [], []>} : vector<16x16xf32>, vector<16x16xf32>, vector<16x16xf32> -> vector<16x16xf32>
    %179 = arith.addf %173, %178 : vector<16x16xf32>
    %180 = vector.broadcast %166 : vector<1x16xf32> to vector<16x16xf32>
    %181 = arith.addf %179, %180 : vector<16x16xf32>
    %cst_50 = arith.constant 0.000000e+00 : f32
    %182 = vector.broadcast %cst_50 : f32 to vector<16x16xf32>
    %183 = arith.maximumf %181, %182 : vector<16x16xf32>
    %cst_51 = arith.constant dense<0.000000e+00> : vector<8x16xf32>
    %184 = tpu.matmul %7, %183, %cst_51 {dimension_numbers = #tpu.dot_dimension_numbers<[1], [0], [0], [1], [0, 0, 1, 1], [], []>} : vector<8x16xf32>, vector<16x16xf32>, vector<8x16xf32> -> vector<8x16xf32>
    %185 = vector.broadcast %162 : vector<1x16xf32> to vector<8x16xf32>
    %186 = arith.mulf %184, %185 : vector<8x16xf32>
    %187 = vector.broadcast %163 : vector<1x16xf32> to vector<8x16xf32>
    %188 = arith.addf %186, %187 : vector<8x16xf32>
    %cst_52 = arith.constant dense<0.000000e+00> : vector<8x16xf32>
    %189 = tpu.matmul %188, %156, %cst_52 {dimension_numbers = #tpu.dot_dimension_numbers<[1], [0], [0], [1], [0, 0, 1, 1], [], []>} : vector<8x16xf32>, vector<16x16xf32>, vector<8x16xf32> -> vector<8x16xf32>
    %190 = vector.broadcast %164 : vector<1x16xf32> to vector<8x16xf32>
    %191 = arith.mulf %151, %190 : vector<8x16xf32>
    %192 = vector.broadcast %165 : vector<1x16xf32> to vector<8x16xf32>
    %193 = arith.addf %191, %192 : vector<8x16xf32>
    %cst_53 = arith.constant dense<0.000000e+00> : vector<8x16xf32>
    %194 = tpu.matmul %193, %157, %cst_53 {dimension_numbers = #tpu.dot_dimension_numbers<[1], [0], [0], [1], [0, 0, 1, 1], [], []>} : vector<8x16xf32>, vector<16x16xf32>, vector<8x16xf32> -> vector<8x16xf32>
    %195 = arith.addf %189, %194 : vector<8x16xf32>
    %196 = vector.broadcast %167 : vector<1x16xf32> to vector<8x16xf32>
    %197 = arith.addf %195, %196 : vector<8x16xf32>
    %cst_54 = arith.constant 0.000000e+00 : f32
    %198 = vector.broadcast %cst_54 : f32 to vector<8x16xf32>
    %199 = arith.maximumf %197, %198 : vector<8x16xf32>
    %c0_55 = arith.constant 0 : index
    %c0_56 = arith.constant 0 : index
    %c0_57 = arith.constant 0 : index
    %200 = vector.load %arg6[%c0_55, %c0_56, %c0_57] : memref<1x8x16xf32, #tpu.memory_space<vmem>>, vector<1x8x16xf32>
    %201 = vector.shape_cast %200 : vector<1x8x16xf32> to vector<8x16xf32>
    %202 = vector.shape_cast %199 : vector<8x16xf32> to vector<1x8x16xf32>
    tpu.vector_store %arg6[%c0_55, %c0_56, %c0_57], %202 {strides = array<i32>} : memref<1x8x16xf32, #tpu.memory_space<vmem>>, vector<1x8x16xf32>,
    return
  }
  func.func @transform_0(%arg0: i32) -> (i32, i32, i32) {
    %c0_i32 = arith.constant 0 : i32
    %c0_i32_0 = arith.constant 0 : i32
    %c0_i32_1 = arith.constant 0 : i32
    return %arg0, %c0_i32, %c0_i32_0 : i32, i32, i32
  }
  func.func @transform_1(%arg0: i32) -> (i32, i32, i32) {
    %c0_i32 = arith.constant 0 : i32
    %c0_i32_0 = arith.constant 0 : i32
    %c0_i32_1 = arith.constant 0 : i32
    return %arg0, %c0_i32, %c0_i32_0 : i32, i32, i32
  }
  func.func @transform_2(%arg0: i32) -> (i32, i32, i32) {
    %c0_i32 = arith.constant 0 : i32
    %c0_i32_0 = arith.constant 0 : i32
    %c0_i32_1 = arith.constant 0 : i32
    return %arg0, %c0_i32, %c0_i32_0 : i32, i32, i32
  }
  func.func @transform_3(%arg0: i32) -> (i32, i32, i32) {
    %c0_i32 = arith.constant 0 : i32
    %c0_i32_0 = arith.constant 0 : i32
    %c0_i32_1 = arith.constant 0 : i32
    return %arg0, %c0_i32, %c0_i32_0 : i32, i32, i32
  }
  func.func @transform_4(%arg0: i32) -> (i32, i32, i32, i32) {
    %c0_i32 = arith.constant 0 : i32
    %c0_i32_0 = arith.constant 0 : i32
    %c0_i32_1 = arith.constant 0 : i32
    %c0_i32_2 = arith.constant 0 : i32
    return %arg0, %c0_i32, %c0_i32_0, %c0_i32_1 : i32, i32, i32, i32
  }
  func.func @transform_5(%arg0: i32) -> (i32, i32, i32) {
    %c0_i32 = arith.constant 0 : i32
    %c0_i32_0 = arith.constant 0 : i32
    %c0_i32_1 = arith.constant 0 : i32
    return %arg0, %c0_i32, %c0_i32_0 : i32, i32, i32
  }
}

</mosaic_0001>

<llo_original>
// kernel: model_forward.3
$region0: #{model_forward.3}
  #allocation0 [shape = 'u32[]', space=smem, size = 0x4, offset = 0x4, fixed_abs, tag = 'smem constant byte address 0x4 - core index']
  #allocation1 [shape = 'u32[72,128]{1,0:T(1,128)}', space=vmem, size = 0x9000, scoped, tag = 'internal scratch']
  %s0 = inlined_call_operand.vmem [shape: f32[5,8,16], index: 0, kind: input, shape index: {}]
  %s1 = inlined_call_operand.vmem [shape: f32[15,16,128], index: 1, kind: input, shape index: {}]
  %s2 = inlined_call_operand.vmem [shape: f32[3,128,128], index: 2, kind: input, shape index: {}]
  %s3 = inlined_call_operand.vmem [shape: f32[3,128,128], index: 3, kind: input, shape index: {}]
  %s4 = inlined_call_operand.vmem [shape: f32[8,128], index: 4, kind: input, shape index: {}]
  %s5 = inlined_call_operand.vmem [shape: f32[8,128], index: 5, kind: output, shape index: {}]
  %s6 = sld [smem:[#allocation0]]
  $region30: #{model_forward.3} parent=0
    _
  %s8 = ssub.s32 1, %s6
  %s9 = scalar_select 0, %s8, %s6
  // Predicated region
  $region2: #{model_forward.3} parent=0 // pred_check
    _
  $region3: #{model_forward.3} parent=0 // pred_check_branch
    %11 = sbr.rel (0) target = $region5
  $region4: #{model_forward.3} parent=0 // pred_region
    _
  $region5: #{model_forward.3} parent=0 // pred_fallthru
    _
  // Predicated region
  $region6: #{model_forward.3} parent=0 // pred_check
    _
  $region7: #{model_forward.3} parent=0 // pred_check_branch
    %13 = sbr.rel (0) target = $region9
  $region8: #{model_forward.3} parent=0 // pred_region
    _
  $region9: #{model_forward.3} parent=0 // pred_fallthru
    _
  // Predicated region
  $region10: #{model_forward.3} parent=0 // pred_check
    _
  $region11: #{model_forward.3} parent=0 // pred_check_branch
    %15 = sbr.rel (0) target = $region13
  $region12: #{model_forward.3} parent=0 // pred_region
    _
  $region13: #{model_forward.3} parent=0 // pred_fallthru
    _
  // Predicated region
  $region14: #{model_forward.3} parent=0 // pred_check
    _
  $region15: #{model_forward.3} parent=0 // pred_check_branch
    %17 = sbr.rel (0) target = $region17
  $region16: #{model_forward.3} parent=0 // pred_region
    _
  $region17: #{model_forward.3} parent=0 // pred_fallthru
    _
  // Predicated region
  $region18: #{model_forward.3} parent=0 // pred_check
    _
  $region19: #{model_forward.3} parent=0 // pred_check_branch
    %19 = sbr.rel (0) target = $region21
  $region20: #{model_forward.3} parent=0 // pred_region
    _
  $region21: #{model_forward.3} parent=0 // pred_fallthru
    _
  %v20 = vlaneseq
  %v21 = vshrl.u32 %v20, 7
  %v22 = vlaneseq
  %v23 = vand.u32 %v22, 127
  %v24 = vadd.s32 %v23, 1
  %vm25 = vcmp.eq.s32.totalorder %v21, %v24
  %v26 = vsel %vm25, 1, 0
  %v27 = vcvt.s32.f32 %v26
  %v28 = vadd.s32 %v21, 1
  %vm29 = vcmp.eq.s32.totalorder %v28, %v23
  %v30 = vsel %vm29, 1, 0
  %v31 = vcvt.s32.f32 %v30
  %v32 = vld [vmem:[%s0] sm:$0xff]
  %s33 = scalar_lea.vmem %s0, 8
  %v34 = vld [vmem:[%s33] sm:$0xff]
  %s35 = scalar_lea.vmem %s0, 16
  %v36 = vld [vmem:[%s35] sm:$0xff]
  %s37 = scalar_lea.vmem %s0, 24
  %v38 = vld [vmem:[%s37] sm:$0xff]
  %s39 = scalar_lea.vmem %s0, 32
  %v40 = vld [vmem:[%s39] sm:$0xff]
  %v41 = vld [vmem:[%s1] sm:$0xff]
  %v42 = vld [vmem:[%s1 + $0x8] sm:$0xff]
  %s43 = scalar_lea.vmem %s1, 16
  %v44 = vld [vmem:[%s43] sm:$0xff]
  %v45 = vld [vmem:[%s43 + $0x8] sm:$0xff]
  %vm46 = vcmask 130048
  %v48 = vsel %vm46, %v34, 0
  %50 = vmatpush.msra.mxu0 0.0
  %51 = vmatpush.msra.mxu0 0.0
  %52 = vmatpush.msra.mxu0 0.0
  %53 = vmatpush.msra.mxu0 0.0
  %54 = vmatpush.msra.mxu0 0.0
  %55 = vmatpush.msra.mxu0 0.0
  %56 = vmatpush.msra.mxu0 0.0
  %57 = vmatpush.msra.mxu0 0.0
  %58 = vmatpush.msra.mxu0 0.0
  %59 = vmatpush.msra.mxu0 0.0
  %60 = vmatpush.msra.mxu0 0.0
  %61 = vmatpush.msra.mxu0 0.0
  %62 = vmatpush.msra.mxu0 0.0
  %63 = vmatpush.msra.mxu0 0.0
  %64 = vmatpush.msra.mxu0 %v45
  %65 = vmatpush.msra.mxu0 %v44
  %66 = vmatmul.f32.gmra.mxu0 %v48
  %v67 = vpop.f32.mrf.mxu0
  %v68 = vadd.f32 0.0, %v67
  %69 = vdwg.mxu0
  %v71 = vsel %vm46, %v32, 0
  %73 = vmatpush.msra.mxu0 0.0
  %74 = vmatpush.msra.mxu0 0.0
  %75 = vmatpush.msra.mxu0 0.0
  %76 = vmatpush.msra.mxu0 0.0
  %77 = vmatpush.msra.mxu0 0.0
  %78 = vmatpush.msra.mxu0 0.0
  %79 = vmatpush.msra.mxu0 0.0
  %80 = vmatpush.msra.mxu0 0.0
  %81 = vmatpush.msra.mxu0 0.0
  %82 = vmatpush.msra.mxu0 0.0
  %83 = vmatpush.msra.mxu0 0.0
  %84 = vmatpush.msra.mxu0 0.0
  %85 = vmatpush.msra.mxu0 0.0
  %86 = vmatpush.msra.mxu0 0.0
  %87 = vmatpush.msra.mxu0 %v42
  %88 = vmatpush.msra.mxu0 %v41
  %89 = vmatmul.f32.gmra.mxu0 %v71
  %v90 = vpop.f32.mrf.mxu0
  %v91 = vadd.f32 %v68, %v90
  %92 = vdwg.mxu0
  %s93 = scalar_lea.vmem %s1, 32
  %v94 = vld [vmem:[%s93] sm:$0xff]
  %v95 = vld [vmem:[%s93 + $0x8] sm:$0xff]
  %v97 = vsel %vm46, %v36, 0
  %99 = vmatpush.msra.mxu0 0.0
  %100 = vmatpush.msra.mxu0 0.0
  %101 = vmatpush.msra.mxu0 0.0
  %102 = vmatpush.msra.mxu0 0.0
  %103 = vmatpush.msra.mxu0 0.0
  %104 = vmatpush.msra.mxu0 0.0
  %105 = vmatpush.msra.mxu0 0.0
  %106 = vmatpush.msra.mxu0 0.0
  %107 = vmatpush.msra.mxu0 0.0
  %108 = vmatpush.msra.mxu0 0.0
  %109 = vmatpush.msra.mxu0 0.0
  %110 = vmatpush.msra.mxu0 0.0
  %111 = vmatpush.msra.mxu0 0.0
  %112 = vmatpush.msra.mxu0 0.0
  %113 = vmatpush.msra.mxu0 %v95
  %114 = vmatpush.msra.mxu0 %v94
  %115 = vmatmul.f32.gmra.mxu0 %v97
  %v116 = vpop.f32.mrf.mxu0
  %v117 = vadd.f32 0.0, %v116
  %118 = vdwg.mxu0
  %v119 = vadd.f32 %v91, %v117
  %s120 = scalar_lea.vmem %s1, 48
  %v121 = vld [vmem:[%s120] sm:$0xff]
  %v122 = vld [vmem:[%s120 + $0x8] sm:$0xff]
  %v124 = vsel %vm46, %v38, 0
  %126 = vmatpush.msra.mxu0 0.0
  %127 = vmatpush.msra.mxu0 0.0
  %128 = vmatpush.msra.mxu0 0.0
  %129 = vmatpush.msra.mxu0 0.0
  %130 = vmatpush.msra.mxu0 0.0
  %131 = vmatpush.msra.mxu0 0.0
  %132 = vmatpush.msra.mxu0 0.0
  %133 = vmatpush.msra.mxu0 0.0
  %134 = vmatpush.msra.mxu0 0.0
  %135 = vmatpush.msra.mxu0 0.0
  %136 = vmatpush.msra.mxu0 0.0
  %137 = vmatpush.msra.mxu0 0.0
  %138 = vmatpush.msra.mxu0 0.0
  %139 = vmatpush.msra.mxu0 0.0
  %140 = vmatpush.msra.mxu0 %v122
  %141 = vmatpush.msra.mxu0 %v121
  %142 = vmatmul.f32.gmra.mxu0 %v124
  %v143 = vpop.f32.mrf.mxu0
  %v144 = vadd.f32 0.0, %v143
  %145 = vdwg.mxu0
  %v146 = vadd.f32 %v119, %v144
  %s147 = scalar_lea.vmem %s1, 64
  %v148 = vld [vmem:[%s147] sm:$0xff]
  %v149 = vld [vmem:[%s147 + $0x8] sm:$0xff]
  %v151 = vsel %vm46, %v40, 0
  %153 = vmatpush.msra.mxu0 0.0
  %154 = vmatpush.msra.mxu0 0.0
  %155 = vmatpush.msra.mxu0 0.0
  %156 = vmatpush.msra.mxu0 0.0
  %157 = vmatpush.msra.mxu0 0.0
  %158 = vmatpush.msra.mxu0 0.0
  %159 = vmatpush.msra.mxu0 0.0
  %160 = vmatpush.msra.mxu0 0.0
  %161 = vmatpush.msra.mxu0 0.0
  %162 = vmatpush.msra.mxu0 0.0
  %163 = vmatpush.msra.mxu0 0.0
  %164 = vmatpush.msra.mxu0 0.0
  %165 = vmatpush.msra.mxu0 0.0
  %166 = vmatpush.msra.mxu0 0.0
  %167 = vmatpush.msra.mxu0 %v149
  %168 = vmatpush.msra.mxu0 %v148
  %169 = vmatmul.f32.gmra.mxu0 %v151
  %v170 = vpop.f32.mrf.mxu0
  %v171 = vadd.f32 0.0, %v170
  %172 = vdwg.mxu0
  %v173 = vadd.f32 %v146, %v171
  %s174 = scalar_lea.vmem %s1, 80
  %v175 = vld [vmem:[%s174] sm:$0xff]
  %v176 = vld [vmem:[%s174 + $0x8] sm:$0xff]
  %s177 = scalar_lea.vmem %s1, 96
  %v178 = vld [vmem:[%s177] sm:$0xff]
  %v179 = vld [vmem:[%s177 + $0x8] sm:$0xff]
  %180 = vmatpush.msra.mxu0 0.0
  %181 = vmatpush.msra.mxu0 0.0
  %182 = vmatpush.msra.mxu0 0.0
  %183 = vmatpush.msra.mxu0 0.0
  %184 = vmatpush.msra.mxu0 0.0
  %185 = vmatpush.msra.mxu0 0.0
  %186 = vmatpush.msra.mxu0 0.0
  %187 = vmatpush.msra.mxu0 0.0
  %188 = vmatpush.msra.mxu0 0.0
  %189 = vmatpush.msra.mxu0 0.0
  %190 = vmatpush.msra.mxu0 0.0
  %191 = vmatpush.msra.mxu0 0.0
  %192 = vmatpush.msra.mxu0 0.0
  %193 = vmatpush.msra.mxu0 0.0
  %194 = vmatpush.msra.mxu0 %v179
  %195 = vmatpush.msra.mxu0 %v178
  %196 = vmatmul.f32.gmra.mxu0 %v48
  %v197 = vpop.f32.mrf.mxu0
  %v198 = vadd.f32 0.0, %v197
  %199 = vdwg.mxu0
  %200 = vmatpush.msra.mxu0 0.0
  %201 = vmatpush.msra.mxu0 0.0
  %202 = vmatpush.msra.mxu0 0.0
  %203 = vmatpush.msra.mxu0 0.0
  %204 = vmatpush.msra.mxu0 0.0
  %205 = vmatpush.msra.mxu0 0.0
  %206 = vmatpush.msra.mxu0 0.0
  %207 = vmatpush.msra.mxu0 0.0
  %208 = vmatpush.msra.mxu0 0.0
  %209 = vmatpush.msra.mxu0 0.0
  %210 = vmatpush.msra.mxu0 0.0
  %211 = vmatpush.msra.mxu0 0.0
  %212 = vmatpush.msra.mxu0 0.0
  %213 = vmatpush.msra.mxu0 0.0
  %214 = vmatpush.msra.mxu0 %v176
  %215 = vmatpush.msra.mxu0 %v175
  %216 = vmatmul.f32.gmra.mxu0 %v71
  %v217 = vpop.f32.mrf.mxu0
  %v218 = vadd.f32 %v198, %v217
  %219 = vdwg.mxu0
  %s220 = scalar_lea.vmem %s1, 112
  %v221 = vld [vmem:[%s220] sm:$0xff]
  %v222 = vld [vmem:[%s220 + $0x8] sm:$0xff]
  %223 = vmatpush.msra.mxu0 0.0
  %224 = vmatpush.msra.mxu0 0.0
  %225 = vmatpush.msra.mxu0 0.0
  %226 = vmatpush.msra.mxu0 0.0
  %227 = vmatpush.msra.mxu0 0.0
  %228 = vmatpush.msra.mxu0 0.0
  %229 = vmatpush.msra.mxu0 0.0
  %230 = vmatpush.msra.mxu0 0.0
  %231 = vmatpush.msra.mxu0 0.0
  %232 = vmatpush.msra.mxu0 0.0
  %233 = vmatpush.msra.mxu0 0.0
  %234 = vmatpush.msra.mxu0 0.0
  %235 = vmatpush.msra.mxu0 0.0
  %236 = vmatpush.msra.mxu0 0.0
  %237 = vmatpush.msra.mxu0 %v222
  %238 = vmatpush.msra.mxu0 %v221
  %239 = vmatmul.f32.gmra.mxu0 %v97
  %v240 = vpop.f32.mrf.mxu0
  %v241 = vadd.f32 0.0, %v240
  %242 = vdwg.mxu0
  %v243 = vadd.f32 %v218, %v241
  %s244 = scalar_lea.vmem %s1, 128
  %v245 = vld [vmem:[%s244] sm:$0xff]
  %v246 = vld [vmem:[%s244 + $0x8] sm:$0xff]
  %247 = vmatpush.msra.mxu0 0.0
  %248 = vmatpush.msra.mxu0 0.0
  %249 = vmatpush.msra.mxu0 0.0
  %250 = vmatpush.msra.mxu0 0.0
  %251 = vmatpush.msra.mxu0 0.0
  %252 = vmatpush.msra.mxu0 0.0
  %253 = vmatpush.msra.mxu0 0.0
  %254 = vmatpush.msra.mxu0 0.0
  %255 = vmatpush.msra.mxu0 0.0
  %256 = vmatpush.msra.mxu0 0.0
  %257 = vmatpush.msra.mxu0 0.0
  %258 = vmatpush.msra.mxu0 0.0
  %259 = vmatpush.msra.mxu0 0.0
  %260 = vmatpush.msra.mxu0 0.0
  %261 = vmatpush.msra.mxu0 %v246
  %262 = vmatpush.msra.mxu0 %v245
  %263 = vmatmul.f32.gmra.mxu0 %v124
  %v264 = vpop.f32.mrf.mxu0
  %v265 = vadd.f32 0.0, %v264
  %266 = vdwg.mxu0
  %v267 = vadd.f32 %v243, %v265
  %s268 = scalar_lea.vmem %s1, 144
  %v269 = vld [vmem:[%s268] sm:$0xff]
  %v270 = vld [vmem:[%s268 + $0x8] sm:$0xff]
  %271 = vmatpush.msra.mxu0 0.0
  %272 = vmatpush.msra.mxu0 0.0
  %273 = vmatpush.msra.mxu0 0.0
  %274 = vmatpush.msra.mxu0 0.0
  %275 = vmatpush.msra.mxu0 0.0
  %276 = vmatpush.msra.mxu0 0.0
  %277 = vmatpush.msra.mxu0 0.0
  %278 = vmatpush.msra.mxu0 0.0
  %279 = vmatpush.msra.mxu0 0.0
  %280 = vmatpush.msra.mxu0 0.0
  %281 = vmatpush.msra.mxu0 0.0
  %282 = vmatpush.msra.mxu0 0.0
  %283 = vmatpush.msra.mxu0 0.0
  %284 = vmatpush.msra.mxu0 0.0
  %285 = vmatpush.msra.mxu0 %v270
  %286 = vmatpush.msra.mxu0 %v269
  %287 = vmatmul.f32.gmra.mxu0 %v151
  %v288 = vpop.f32.mrf.mxu0
  %v289 = vadd.f32 0.0, %v288
  %290 = vdwg.mxu0
  %v291 = vadd.f32 %v267, %v289
  %s292 = scalar_lea.vmem %s1, 160
  %v293 = vld [vmem:[%s292] sm:$0xff]
  %v294 = vld [vmem:[%s292 + $0x8] sm:$0xff]
  %s295 = scalar_lea.vmem %s1, 176
  %v296 = vld [vmem:[%s295] sm:$0xff]
  %v297 = vld [vmem:[%s295 + $0x8] sm:$0xff]
  %298 = vmatpush.msra.mxu0 0.0
  %299 = vmatpush.msra.mxu0 0.0
  %300 = vmatpush.msra.mxu0 0.0
  %301 = vmatpush.msra.mxu0 0.0
  %302 = vmatpush.msra.mxu0 0.0
  %303 = vmatpush.msra.mxu0 0.0
  %304 = vmatpush.msra.mxu0 0.0
  %305 = vmatpush.msra.mxu0 0.0
  %306 = vmatpush.msra.mxu0 0.0
  %307 = vmatpush.msra.mxu0 0.0
  %308 = vmatpush.msra.mxu0 0.0
  %309 = vmatpush.msra.mxu0 0.0
  %310 = vmatpush.msra.mxu0 0.0
  %311 = vmatpush.msra.mxu0 0.0
  %312 = vmatpush.msra.mxu0 %v297
  %313 = vmatpush.msra.mxu0 %v296
  %314 = vmatmul.f32.gmra.mxu0 %v48
  %v315 = vpop.f32.mrf.mxu0
  %v316 = vadd.f32 0.0, %v315
  %317 = vdwg.mxu0
  %318 = vmatpush.msra.mxu0 0.0
  %319 = vmatpush.msra.mxu0 0.0
  %320 = vmatpush.msra.mxu0 0.0
  %321 = vmatpush.msra.mxu0 0.0
  %322 = vmatpush.msra.mxu0 0.0
  %323 = vmatpush.msra.mxu0 0.0
  %324 = vmatpush.msra.mxu0 0.0
  %325 = vmatpush.msra.mxu0 0.0
  %326 = vmatpush.msra.mxu0 0.0
  %327 = vmatpush.msra.mxu0 0.0
  %328 = vmatpush.msra.mxu0 0.0
  %329 = vmatpush.msra.mxu0 0.0
  %330 = vmatpush.msra.mxu0 0.0
  %331 = vmatpush.msra.mxu0 0.0
  %332 = vmatpush.msra.mxu0 %v294
  %333 = vmatpush.msra.mxu0 %v293
  %334 = vmatmul.f32.gmra.mxu0 %v71
  %v335 = vpop.f32.mrf.mxu0
  %v336 = vadd.f32 %v316, %v335
  %337 = vdwg.mxu0
  %s338 = scalar_lea.vmem %s1, 192
  %v339 = vld [vmem:[%s338] sm:$0xff]
  %v340 = vld [vmem:[%s338 + $0x8] sm:$0xff]
  %341 = vmatpush.msra.mxu0 0.0
  %342 = vmatpush.msra.mxu0 0.0
  %343 = vmatpush.msra.mxu0 0.0
  %344 = vmatpush.msra.mxu0 0.0
  %345 = vmatpush.msra.mxu0 0.0
  %346 = vmatpush.msra.mxu0 0.0
  %347 = vmatpush.msra.mxu0 0.0
  %348 = vmatpush.msra.mxu0 0.0
  %349 = vmatpush.msra.mxu0 0.0
  %350 = vmatpush.msra.mxu0 0.0
  %351 = vmatpush.msra.mxu0 0.0
  %352 = vmatpush.msra.mxu0 0.0
  %353 = vmatpush.msra.mxu0 0.0
  %354 = vmatpush.msra.mxu0 0.0
  %355 = vmatpush.msra.mxu0 %v340
  %356 = vmatpush.msra.mxu0 %v339
  %357 = vmatmul.f32.gmra.mxu0 %v97
  %v358 = vpop.f32.mrf.mxu0
  %v359 = vadd.f32 0.0, %v358
  %360 = vdwg.mxu0
  %v361 = vadd.f32 %v336, %v359
  %s362 = scalar_lea.vmem %s1, 208
  %v363 = vld [vmem:[%s362] sm:$0xff]
  %v364 = vld [vmem:[%s362 + $0x8] sm:$0xff]
  %365 = vmatpush.msra.mxu0 0.0
  %366 = vmatpush.msra.mxu0 0.0
  %367 = vmatpush.msra.mxu0 0.0
  %368 = vmatpush.msra.mxu0 0.0
  %369 = vmatpush.msra.mxu0 0.0
  %370 = vmatpush.msra.mxu0 0.0
  %371 = vmatpush.msra.mxu0 0.0
  %372 = vmatpush.msra.mxu0 0.0
  %373 = vmatpush.msra.mxu0 0.0
  %374 = vmatpush.msra.mxu0 0.0
  %375 = vmatpush.msra.mxu0 0.0
  %376 = vmatpush.msra.mxu0 0.0
  %377 = vmatpush.msra.mxu0 0.0
  %378 = vmatpush.msra.mxu0 0.0
  %379 = vmatpush.msra.mxu0 %v364
  %380 = vmatpush.msra.mxu0 %v363
  %381 = vmatmul.f32.gmra.mxu0 %v124
  %v382 = vpop.f32.mrf.mxu0
  %v383 = vadd.f32 0.0, %v382
  %384 = vdwg.mxu0
  %v385 = vadd.f32 %v361, %v383
  %s386 = scalar_lea.vmem %s1, 224
  %v387 = vld [vmem:[%s386] sm:$0xff]
  %v388 = vld [vmem:[%s386 + $0x8] sm:$0xff]
  %389 = vmatpush.msra.mxu0 0.0
  %390 = vmatpush.msra.mxu0 0.0
  %391 = vmatpush.msra.mxu0 0.0
  %392 = vmatpush.msra.mxu0 0.0
  %393 = vmatpush.msra.mxu0 0.0
  %394 = vmatpush.msra.mxu0 0.0
  %395 = vmatpush.msra.mxu0 0.0
  %396 = vmatpush.msra.mxu0 0.0
  %397 = vmatpush.msra.mxu0 0.0
  %398 = vmatpush.msra.mxu0 0.0
  %399 = vmatpush.msra.mxu0 0.0
  %400 = vmatpush.msra.mxu0 0.0
  %401 = vmatpush.msra.mxu0 0.0
  %402 = vmatpush.msra.mxu0 0.0
  %403 = vmatpush.msra.mxu0 %v388
  %404 = vmatpush.msra.mxu0 %v387
  %405 = vmatmul.f32.gmra.mxu0 %v151
  %v406 = vpop.f32.mrf.mxu0
  %v407 = vadd.f32 0.0, %v406
  %408 = vdwg.mxu0
  %v409 = vadd.f32 %v385, %v407
  %v410 = vld [vmem:[%s4] sm:$0x1]
  %vm411 = vcmask 64512
  %v413 = vsel %vm411, %v27, 0
  %415 = vmatpush.msra.mxu0 0.0
  %416 = vmatpush.msra.mxu0 0.0
  %417 = vmatpush.msra.mxu0 0.0
  %418 = vmatpush.msra.mxu0 0.0
  %419 = vmatpush.msra.mxu0 0.0
  %420 = vmatpush.msra.mxu0 0.0
  %421 = vmatpush.msra.mxu0 0.0
  %422 = vmatpush.msra.mxu0 0.0
  %423 = vmatpush.msra.mxu0 0.0
  %424 = vmatpush.msra.mxu0 0.0
  %425 = vmatpush.msra.mxu0 0.0
  %426 = vmatpush.msra.mxu0 0.0
  %427 = vmatpush.msra.mxu0 0.0
  %428 = vmatpush.msra.mxu0 0.0
  %429 = vmatpush.msra.mxu0 0.0
  %430 = vmatpush.msra.mxu0 %v173
  %431 = vmatmul.f32.gmra.mxu0 %v413
  %v432 = vpop.f32.mrf.mxu0
  %v433 = vadd.f32 %v291, %v432
  %434 = vdwg.mxu0
  %v436 = vsel %vm411, %v31, 0
  %438 = vmatpush.msra.mxu0 0.0
  %439 = vmatpush.msra.mxu0 0.0
  %440 = vmatpush.msra.mxu0 0.0
  %441 = vmatpush.msra.mxu0 0.0
  %442 = vmatpush.msra.mxu0 0.0
  %443 = vmatpush.msra.mxu0 0.0
  %444 = vmatpush.msra.mxu0 0.0
  %445 = vmatpush.msra.mxu0 0.0
  %446 = vmatpush.msra.mxu0 0.0
  %447 = vmatpush.msra.mxu0 0.0
  %448 = vmatpush.msra.mxu0 0.0
  %449 = vmatpush.msra.mxu0 0.0
  %450 = vmatpush.msra.mxu0 0.0
  %451 = vmatpush.msra.mxu0 0.0
  %452 = vmatpush.msra.mxu0 0.0
  %453 = vmatpush.msra.mxu0 %v409
  %454 = vmatmul.f32.gmra.mxu0 %v436
  %v455 = vpop.f32.mrf.mxu0
  %v456 = vadd.f32 0.0, %v455
  %457 = vdwg.mxu0
  %v458 = vadd.f32 %v433, %v456
  %v459 = vperm.slane %v410, 0
  %v460 = vadd.f32 %v458, %v459
  %v461 = vmax.f32 %v460, 0.0
  %v462 = vld [vmem:[%s2] sm:$0xff]
  %v463 = vld [vmem:[%s2 + $0x8] sm:$0xff]
  %v464 = vld [vmem:[%s2 + $0x10] sm:$0xff]
  %v465 = vld [vmem:[%s2 + $0x18] sm:$0xff]
  %v466 = vld [vmem:[%s2 + $0x20] sm:$0xff]
  %v467 = vld [vmem:[%s2 + $0x28] sm:$0xff]
  %v468 = vld [vmem:[%s2 + $0x30] sm:$0xff]
  %v469 = vld [vmem:[%s2 + $0x38] sm:$0xff]
  %v470 = vld [vmem:[%s2 + $0x40] sm:$0xff]
  %v471 = vld [vmem:[%s2 + $0x48] sm:$0xff]
  %v472 = vld [vmem:[%s2 + $0x50] sm:$0xff]
  %v473 = vld [vmem:[%s2 + $0x58] sm:$0xff]
  %v474 = vld [vmem:[%s2 + $0x60] sm:$0xff]
  %v475 = vld [vmem:[%s2 + $0x68] sm:$0xff]
  %v476 = vld [vmem:[%s2 + $0x70] sm:$0xff]
  %v477 = vld [vmem:[%s2 + $0x78] sm:$0xff]
  %478 = vmatpush.msra.mxu0 %v477
  %479 = vmatpush.msra.mxu0 %v476
  %480 = vmatpush.msra.mxu0 %v475
  %481 = vmatpush.msra.mxu0 %v474
  %482 = vmatpush.msra.mxu0 %v473
  %483 = vmatpush.msra.mxu0 %v472
  %484 = vmatpush.msra.mxu0 %v471
  %485 = vmatpush.msra.mxu0 %v470
  %486 = vmatpush.msra.mxu0 %v469
  %487 = vmatpush.msra.mxu0 %v468
  %488 = vmatpush.msra.mxu0 %v467
  %489 = vmatpush.msra.mxu0 %v466
  %490 = vmatpush.msra.mxu0 %v465
  %491 = vmatpush.msra.mxu0 %v464
  %492 = vmatpush.msra.mxu0 %v463
  %493 = vmatpush.msra.mxu0 %v462
  %494 = vmatmul.f32.gmra.mxu0 %v461
  %v495 = vpop.f32.mrf.mxu0
  %v496 = vadd.f32 0.0, %v495
  %497 = vdwg.mxu0
  %s498 = scalar_lea.vmem %s2, 128
  %v499 = vld [vmem:[%s498] sm:$0xff]
  %v500 = vld [vmem:[%s498 + $0x8] sm:$0xff]
  %v501 = vld [vmem:[%s498 + $0x10] sm:$0xff]
  %v502 = vld [vmem:[%s498 + $0x18] sm:$0xff]
  %v503 = vld [vmem:[%s498 + $0x20] sm:$0xff]
  %v504 = vld [vmem:[%s498 + $0x28] sm:$0xff]
  %v505 = vld [vmem:[%s498 + $0x30] sm:$0xff]
  %v506 = vld [vmem:[%s498 + $0x38] sm:$0xff]
  %v507 = vld [vmem:[%s498 + $0x40] sm:$0xff]
  %v508 = vld [vmem:[%s498 + $0x48] sm:$0xff]
  %v509 = vld [vmem:[%s498 + $0x50] sm:$0xff]
  %v510 = vld [vmem:[%s498 + $0x58] sm:$0xff]
  %v511 = vld [vmem:[%s498 + $0x60] sm:$0xff]
  %v512 = vld [vmem:[%s498 + $0x68] sm:$0xff]
  %v513 = vld [vmem:[%s498 + $0x70] sm:$0xff]
  %v514 = vld [vmem:[%s498 + $0x78] sm:$0xff]
  %515 = vmatpush.msra.mxu0 %v514
  %516 = vmatpush.msra.mxu0 %v513
  %517 = vmatpush.msra.mxu0 %v512
  %518 = vmatpush.msra.mxu0 %v511
  %519 = vmatpush.msra.mxu0 %v510
  %520 = vmatpush.msra.mxu0 %v509
  %521 = vmatpush.msra.mxu0 %v508
  %522 = vmatpush.msra.mxu0 %v507
  %523 = vmatpush.msra.mxu0 %v506
  %524 = vmatpush.msra.mxu0 %v505
  %525 = vmatpush.msra.mxu0 %v504
  %526 = vmatpush.msra.mxu0 %v503
  %527 = vmatpush.msra.mxu0 %v502
  %528 = vmatpush.msra.mxu0 %v501
  %529 = vmatpush.msra.mxu0 %v500
  %530 = vmatpush.msra.mxu0 %v499
  %531 = vmatmul.f32.gmra.mxu0 %v461
  %v532 = vpop.f32.mrf.mxu0
  %v533 = vadd.f32 0.0, %v532
  %534 = vdwg.mxu0
  %s535 = scalar_lea.vmem %s2, 256
  %v536 = vld [vmem:[%s535] sm:$0xff]
  %v537 = vld [vmem:[%s535 + $0x8] sm:$0xff]
  %v538 = vld [vmem:[%s535 + $0x10] sm:$0xff]
  %v539 = vld [vmem:[%s535 + $0x18] sm:$0xff]
  %v540 = vld [vmem:[%s535 + $0x20] sm:$0xff]
  %v541 = vld [vmem:[%s535 + $0x28] sm:$0xff]
  %v542 = vld [vmem:[%s535 + $0x30] sm:$0xff]
  %v543 = vld [vmem:[%s535 + $0x38] sm:$0xff]
  %v544 = vld [vmem:[%s535 + $0x40] sm:$0xff]
  %v545 = vld [vmem:[%s535 + $0x48] sm:$0xff]
  %v546 = vld [vmem:[%s535 + $0x50] sm:$0xff]
  %v547 = vld [vmem:[%s535 + $0x58] sm:$0xff]
  %v548 = vld [vmem:[%s535 + $0x60] sm:$0xff]
  %v549 = vld [vmem:[%s535 + $0x68] sm:$0xff]
  %v550 = vld [vmem:[%s535 + $0x70] sm:$0xff]
  %v551 = vld [vmem:[%s535 + $0x78] sm:$0xff]
  %552 = vmatpush.msra.mxu0 %v551
  %553 = vmatpush.msra.mxu0 %v550
  %554 = vmatpush.msra.mxu0 %v549
  %555 = vmatpush.msra.mxu0 %v548
  %556 = vmatpush.msra.mxu0 %v547
  %557 = vmatpush.msra.mxu0 %v546
  %558 = vmatpush.msra.mxu0 %v545
  %559 = vmatpush.msra.mxu0 %v544
  %560 = vmatpush.msra.mxu0 %v543
  %561 = vmatpush.msra.mxu0 %v542
  %562 = vmatpush.msra.mxu0 %v541
  %563 = vmatpush.msra.mxu0 %v540
  %564 = vmatpush.msra.mxu0 %v539
  %565 = vmatpush.msra.mxu0 %v538
  %566 = vmatpush.msra.mxu0 %v537
  %567 = vmatpush.msra.mxu0 %v536
  %568 = vmatmul.f32.gmra.mxu0 %v461
  %v569 = vpop.f32.mrf.mxu0
  %v570 = vadd.f32 0.0, %v569
  %571 = vdwg.mxu0
  %v572 = vld [vmem:[%s4 + $0x1] sm:$0x1]
  %573 = vmatpush.msra.mxu0 0.0
  %574 = vmatpush.msra.mxu0 0.0
  %575 = vmatpush.msra.mxu0 0.0
  %576 = vmatpush.msra.mxu0 0.0
  %577 = vmatpush.msra.mxu0 0.0
  %578 = vmatpush.msra.mxu0 0.0
  %579 = vmatpush.msra.mxu0 0.0
  %580 = vmatpush.msra.mxu0 0.0
  %581 = vmatpush.msra.mxu0 0.0
  %582 = vmatpush.msra.mxu0 0.0
  %583 = vmatpush.msra.mxu0 0.0
  %584 = vmatpush.msra.mxu0 0.0
  %585 = vmatpush.msra.mxu0 0.0
  %586 = vmatpush.msra.mxu0 0.0
  %587 = vmatpush.msra.mxu0 0.0
  %588 = vmatpush.msra.mxu0 %v496
  %589 = vmatmul.f32.gmra.mxu0 %v413
  %v590 = vpop.f32.mrf.mxu0
  %v591 = vadd.f32 %v533, %v590
  %592 = vdwg.mxu0
  %593 = vmatpush.msra.mxu0 0.0
  %594 = vmatpush.msra.mxu0 0.0
  %595 = vmatpush.msra.mxu0 0.0
  %596 = vmatpush.msra.mxu0 0.0
  %597 = vmatpush.msra.mxu0 0.0
  %598 = vmatpush.msra.mxu0 0.0
  %599 = vmatpush.msra.mxu0 0.0
  %600 = vmatpush.msra.mxu0 0.0
  %601 = vmatpush.msra.mxu0 0.0
  %602 = vmatpush.msra.mxu0 0.0
  %603 = vmatpush.msra.mxu0 0.0
  %604 = vmatpush.msra.mxu0 0.0
  %605 = vmatpush.msra.mxu0 0.0
  %606 = vmatpush.msra.mxu0 0.0
  %607 = vmatpush.msra.mxu0 0.0
  %608 = vmatpush.msra.mxu0 %v570
  %609 = vmatmul.f32.gmra.mxu0 %v436
  %v610 = vpop.f32.mrf.mxu0
  %v611 = vadd.f32 0.0, %v610
  %612 = vdwg.mxu0
  %v613 = vadd.f32 %v591, %v611
  %v614 = vperm.slane %v572, 0
  %v615 = vadd.f32 %v613, %v614
  %v616 = vmax.f32 %v615, 0.0
  %v617 = vld [vmem:[%s3] sm:$0xff]
  %v618 = vld [vmem:[%s3 + $0x8] sm:$0xff]
  %v619 = vld [vmem:[%s3 + $0x10] sm:$0xff]
  %v620 = vld [vmem:[%s3 + $0x18] sm:$0xff]
  %v621 = vld [vmem:[%s3 + $0x20] sm:$0xff]
  %v622 = vld [vmem:[%s3 + $0x28] sm:$0xff]
  %v623 = vld [vmem:[%s3 + $0x30] sm:$0xff]
  %v624 = vld [vmem:[%s3 + $0x38] sm:$0xff]
  %v625 = vld [vmem:[%s3 + $0x40] sm:$0xff]
  %v626 = vld [vmem:[%s3 + $0x48] sm:$0xff]
  %v627 = vld [vmem:[%s3 + $0x50] sm:$0xff]
  %v628 = vld [vmem:[%s3 + $0x58] sm:$0xff]
  %v629 = vld [vmem:[%s3 + $0x60] sm:$0xff]
  %v630 = vld [vmem:[%s3 + $0x68] sm:$0xff]
  %v631 = vld [vmem:[%s3 + $0x70] sm:$0xff]
  %v632 = vld [vmem:[%s3 + $0x78] sm:$0xff]
  %633 = vmatpush.msra.mxu0 %v632
  %634 = vmatpush.msra.mxu0 %v631
  %635 = vmatpush.msra.mxu0 %v630
  %636 = vmatpush.msra.mxu0 %v629
  %637 = vmatpush.msra.mxu0 %v628
  %638 = vmatpush.msra.mxu0 %v627
  %639 = vmatpush.msra.mxu0 %v626
  %640 = vmatpush.msra.mxu0 %v625
  %641 = vmatpush.msra.mxu0 %v624
  %642 = vmatpush.msra.mxu0 %v623
  %643 = vmatpush.msra.mxu0 %v622
  %644 = vmatpush.msra.mxu0 %v621
  %645 = vmatpush.msra.mxu0 %v620
  %646 = vmatpush.msra.mxu0 %v619
  %647 = vmatpush.msra.mxu0 %v618
  %648 = vmatpush.msra.mxu0 %v617
  %649 = vmatmul.f32.gmra.mxu0 %v616
  %v650 = vpop.f32.mrf.mxu0
  %v651 = vadd.f32 0.0, %v650
  %652 = vdwg.mxu0
  %s653 = scalar_lea.vmem %s3, 128
  %v654 = vld [vmem:[%s653] sm:$0xff]
  %v655 = vld [vmem:[%s653 + $0x8] sm:$0xff]
  %v656 = vld [vmem:[%s653 + $0x10] sm:$0xff]
  %v657 = vld [vmem:[%s653 + $0x18] sm:$0xff]
  %v658 = vld [vmem:[%s653 + $0x20] sm:$0xff]
  %v659 = vld [vmem:[%s653 + $0x28] sm:$0xff]
  %v660 = vld [vmem:[%s653 + $0x30] sm:$0xff]
  %v661 = vld [vmem:[%s653 + $0x38] sm:$0xff]
  %v662 = vld [vmem:[%s653 + $0x40] sm:$0xff]
  %v663 = vld [vmem:[%s653 + $0x48] sm:$0xff]
  %v664 = vld [vmem:[%s653 + $0x50] sm:$0xff]
  %v665 = vld [vmem:[%s653 + $0x58] sm:$0xff]
  %v666 = vld [vmem:[%s653 + $0x60] sm:$0xff]
  %v667 = vld [vmem:[%s653 + $0x68] sm:$0xff]
  %v668 = vld [vmem:[%s653 + $0x70] sm:$0xff]
  %v669 = vld [vmem:[%s653 + $0x78] sm:$0xff]
  %670 = vmatpush.msra.mxu0 %v669
  %671 = vmatpush.msra.mxu0 %v668
  %672 = vmatpush.msra.mxu0 %v667
  %673 = vmatpush.msra.mxu0 %v666
  %674 = vmatpush.msra.mxu0 %v665
  %675 = vmatpush.msra.mxu0 %v664
  %676 = vmatpush.msra.mxu0 %v663
  %677 = vmatpush.msra.mxu0 %v662
  %678 = vmatpush.msra.mxu0 %v661
  %679 = vmatpush.msra.mxu0 %v660
  %680 = vmatpush.msra.mxu0 %v659
  %681 = vmatpush.msra.mxu0 %v658
  %682 = vmatpush.msra.mxu0 %v657
  %683 = vmatpush.msra.mxu0 %v656
  %684 = vmatpush.msra.mxu0 %v655
  %685 = vmatpush.msra.mxu0 %v654
  %686 = vmatmul.f32.gmra.mxu0 %v616
  %v687 = vpop.f32.mrf.mxu0
  %v688 = vadd.f32 0.0, %v687
  %689 = vdwg.mxu0
  %s690 = scalar_lea.vmem %s3, 256
  %v691 = vld [vmem:[%s690] sm:$0xff]
  %v692 = vld [vmem:[%s690 + $0x8] sm:$0xff]
  %v693 = vld [vmem:[%s690 + $0x10] sm:$0xff]
  %v694 = vld [vmem:[%s690 + $0x18] sm:$0xff]
  %v695 = vld [vmem:[%s690 + $0x20] sm:$0xff]
  %v696 = vld [vmem:[%s690 + $0x28] sm:$0xff]
  %v697 = vld [vmem:[%s690 + $0x30] sm:$0xff]
  %v698 = vld [vmem:[%s690 + $0x38] sm:$0xff]
  %v699 = vld [vmem:[%s690 + $0x40] sm:$0xff]
  %v700 = vld [vmem:[%s690 + $0x48] sm:$0xff]
  %v701 = vld [vmem:[%s690 + $0x50] sm:$0xff]
  %v702 = vld [vmem:[%s690 + $0x58] sm:$0xff]
  %v703 = vld [vmem:[%s690 + $0x60] sm:$0xff]
  %v704 = vld [vmem:[%s690 + $0x68] sm:$0xff]
  %v705 = vld [vmem:[%s690 + $0x70] sm:$0xff]
  %v706 = vld [vmem:[%s690 + $0x78] sm:$0xff]
  %707 = vmatpush.msra.mxu0 %v706
  %708 = vmatpush.msra.mxu0 %v705
  %709 = vmatpush.msra.mxu0 %v704
  %710 = vmatpush.msra.mxu0 %v703
  %711 = vmatpush.msra.mxu0 %v702
  %712 = vmatpush.msra.mxu0 %v701
  %713 = vmatpush.msra.mxu0 %v700
  %714 = vmatpush.msra.mxu0 %v699
  %715 = vmatpush.msra.mxu0 %v698
  %716 = vmatpush.msra.mxu0 %v697
  %717 = vmatpush.msra.mxu0 %v696
  %718 = vmatpush.msra.mxu0 %v695
  %719 = vmatpush.msra.mxu0 %v694
  %720 = vmatpush.msra.mxu0 %v693
  %721 = vmatpush.msra.mxu0 %v692
  %722 = vmatpush.msra.mxu0 %v691
  %723 = vmatmul.f32.gmra.mxu0 %v616
  %v724 = vpop.f32.mrf.mxu0
  %v725 = vadd.f32 0.0, %v724
  %726 = vdwg.mxu0
  %v727 = vld [vmem:[%s4 + $0x2] sm:$0x1]
  %728 = vmatpush.msra.mxu0 0.0
  %729 = vmatpush.msra.mxu0 0.0
  %730 = vmatpush.msra.mxu0 0.0
  %731 = vmatpush.msra.mxu0 0.0
  %732 = vmatpush.msra.mxu0 0.0
  %733 = vmatpush.msra.mxu0 0.0
  %734 = vmatpush.msra.mxu0 0.0
  %735 = vmatpush.msra.mxu0 0.0
  %736 = vmatpush.msra.mxu0 0.0
  %737 = vmatpush.msra.mxu0 0.0
  %738 = vmatpush.msra.mxu0 0.0
  %739 = vmatpush.msra.mxu0 0.0
  %740 = vmatpush.msra.mxu0 0.0
  %741 = vmatpush.msra.mxu0 0.0
  %742 = vmatpush.msra.mxu0 0.0
  %743 = vmatpush.msra.mxu0 %v651
  %744 = vmatmul.f32.gmra.mxu0 %v413
  %v745 = vpop.f32.mrf.mxu0
  %v746 = vadd.f32 %v688, %v745
  %747 = vdwg.mxu0
  %748 = vmatpush.msra.mxu0 0.0
  %749 = vmatpush.msra.mxu0 0.0
  %750 = vmatpush.msra.mxu0 0.0
  %751 = vmatpush.msra.mxu0 0.0
  %752 = vmatpush.msra.mxu0 0.0
  %753 = vmatpush.msra.mxu0 0.0
  %754 = vmatpush.msra.mxu0 0.0
  %755 = vmatpush.msra.mxu0 0.0
  %756 = vmatpush.msra.mxu0 0.0
  %757 = vmatpush.msra.mxu0 0.0
  %758 = vmatpush.msra.mxu0 0.0
  %759 = vmatpush.msra.mxu0 0.0
  %760 = vmatpush.msra.mxu0 0.0
  %761 = vmatpush.msra.mxu0 0.0
  %762 = vmatpush.msra.mxu0 0.0
  %763 = vmatpush.msra.mxu0 %v725
  %764 = vmatmul.f32.gmra.mxu0 %v436
  %v765 = vpop.f32.mrf.mxu0
  %v766 = vadd.f32 0.0, %v765
  %767 = vdwg.mxu0
  %v768 = vadd.f32 %v746, %v766
  %v769 = vperm.slane %v727, 0
  %v770 = vadd.f32 %v768, %v769
  %vm771 = vcmp.lt.s32.totalorder %v23, 5
  %v772 = vxor.u32 %v770, 2147483648
  %v773 = vmul.f32 %v772, 1.442695
  %v774 = vpow.pop %v773
  %v775 = vadd.f32 %v774, 1.0
  %v776 = vrcp.pop %v775
  %v777 = vmul.f32 %v775, %v776
  %v778 = vsub.f32 1.0, %v777
  %v779 = vmul.f32 %v776, %v778
  %v780 = vadd.f32 %v776, %v779
  %vm781 = vweird.f32 %v775
  %vm782 = vweird.f32 %v776
  %vm783 = vmor %vm781, %vm782
  %v784 = vsel %vm783, %v776, %v780
  %v785 = vand.u32 2147483647, %v775
  %vm786 = vcmp.eq.f32.partialorder %v785, 8.507059e+37
  %v787 = vand.u32 %v775, 2147483648
  %v788 = vor.u32 1.1754944e-38, %v787
  %v789 = vsel %vm786, %v788, %v784
  %v790 = vmul.f32 1.0, %v789
  %v791 = vsel %vm771, %v790, 0.0
  %792 = vadd.xlane.f32.xlu0 %v791
  %v793 = vpop.xlane.xlu0 %792
  %v794 = vrcp.pop 5.0
  %v795 = vmul.f32 5.0, %v794
  %v796 = vsub.f32 1.0, %v795
  %v797 = vmul.f32 %v794, %v796
  %v798 = vadd.f32 %v794, %v797
  %vm799 = vweird.f32 %v794
  %v800 = vsel %vm799, %v794, %v798
  %v801 = vmul.f32 %v793, %v800
  %v802 = vsel %vm771, %v770, -inf
  %803 = vmax.xlane.f32.xlu0 %v802
  %v804 = vpop.xlane.xlu0 %803
  %vm805 = vcmp.eq.f32.partialorder %v802, %v804
  %v806 = vsel %vm805, %v23, 128
  %v807 = vand.u32 %v806, 65535
  %v808 = vshra.s32 %v806, 16
  %v809 = vcvt.s32.f32 %v807
  %v810 = vcvt.s32.f32 %v808
  %811 = vmin.xlane.f32.xlu0 %v810
  %v812 = vpop.xlane.xlu0 %811
  %vm813 = vcmp.eq.f32.partialorder %v810, %v812
  %v814 = vsel %vm813, %v809, inf
  %815 = vmin.xlane.f32.xlu0 %v814
  %v816 = vpop.xlane.xlu0 %815
  %v817 = vcvt.f32.s32 %v816
  %v818 = vcvt.f32.s32 %v812
  %v819 = vshll.u32 %v818, 16
  %v820 = vadd.s32 %v819, %v817
  %vm821 = vcmp.eq.s32.totalorder %v23, %v820
  %v822 = vsel %vm821, 1, 0
  %v823 = vcvt.s32.f32 %v822
  %vm824 = vcmp.eq.s32.totalorder %v23, 8
  %v825 = vsel %vm824, %v801, 0.0
  %v826 = vadd.f32 %v823, %v825
  %827 = vst [vmem:[%s5] sm:$0xff] %v826
  // Predicated region
  $region22: #{model_forward.3} parent=0 // pred_check
    _
  $region23: #{model_forward.3} parent=0 // pred_check_branch
    %829 = sbr.rel (0) target = $region25
  $region24: #{model_forward.3} parent=0 // pred_region
    _
  $region25: #{model_forward.3} parent=0 // pred_fallthru
    _
  // Predicated region
  $region26: #{model_forward.3} parent=0 // pred_check
    _
  $region27: #{model_forward.3} parent=0 // pred_check_branch
    %831 = sbr.rel (0) target = $region29
  $region28: #{model_forward.3} parent=0 // pred_region
    _
  $region29: #{model_forward.3} parent=0 // pred_fallthru
    _

// kernel: model_forward.2
$region0: #{model_forward.2}
  #allocation0 [shape = 'u32[]', space=smem, size = 0x4, offset = 0x4, fixed_abs, tag = 'smem constant byte address 0x4 - core index']
  #allocation1 [shape = 'u32[72,128]{1,0:T(1,128)}', space=vmem, size = 0x9000, scoped, tag = 'internal scratch']
  %s0 = inlined_call_operand.vmem [shape: f32[5,8,16], index: 0, kind: input, shape index: {}]
  %s1 = inlined_call_operand.vmem [shape: f32[5,16,16], index: 1, kind: input, shape index: {}]
  %s2 = inlined_call_operand.vmem [shape: f32[5,16,8], index: 2, kind: input, shape index: {}]
  %s3 = inlined_call_operand.vmem [shape: f32[5,8,16], index: 3, kind: input, shape index: {}]
  %s4 = inlined_call_operand.vmem [shape: f32[5,4,80,16], index: 4, kind: input, shape index: {}]
  %s5 = inlined_call_operand.vmem [shape: f32[5,8,16], index: 5, kind: output, shape index: {}]
  %s6 = sld [smem:[#allocation0]]
  $region53: #{model_forward.2} parent=0
    _
  %s8 = ssub.s32 1, %s6
  %s9 = scalar_select 0, %s8, %s6
  loop: start=0, step=1, limit=7
  $region2: #{model_forward.2} parent=0 // loop_pre_header
    _
  $region3: #{model_forward.2} parent=0 // loop_header
    %s11 = sphi 0, %s15
    %p12 = scmp.ge.s32.totalorder %s11, 7
    %s21 = sphi 0, %s23
    %s24 = sphi 0, %s21
    %s25 = sphi 0, %s24
    %s41 = sphi 0, %s25
    %s47 = sphi 0, %s49
    %s50 = sphi 0, %s47
    %s51 = sphi 0, %s50
    %s67 = sphi 0, %s51
    %s73 = sphi 0, %s75
    %s76 = sphi 0, %s73
    %s77 = sphi 0, %s76
    %s93 = sphi 0, %s77
    %s99 = sphi 0, %s101
    %s102 = sphi 0, %s99
    %s103 = sphi 0, %s102
    %s119 = sphi 0, %s103
    %s125 = sphi 0, %s127
    %s128 = sphi 0, %s125
    %s129 = sphi 0, %s128
    %s145 = sphi 0, %s129
    %s151 = sphi 0, %s153
    %s154 = sphi 0, %s151
    %s155 = sphi 0, %s154
    %s171 = sphi 0, %s155
  $region4: #{model_forward.2} parent=0 // loop_header_branch
    %14 = sbr.rel (%p12) target = $region8
  $region5: #{model_forward.2} parent=0 // loop_body
    %s16 = ssub.s32 %s11, 1
    %s17 = ssub.s32 %s11, 2
    %s18 = sadd.s32 %s11, 1
    %s19 = ssub.s32 %s11, %s18
    %p20 = scmp.eq.s32.totalorder %s19, 0
    %s22 = sadd.s32 %s21, 1
    %s23 = scalar_select %p20, %s21, %s22
    %p26 = pneg %p20
    %p27 = scmp.eq.s32.totalorder %s11, 4
    %p28 = por %p26, %p27
    %p29 = scmp.ne.s32.totalorder %s21, %s24
    %p30 = scmp.eq.s32.totalorder %s11, 0
    %p31 = por %p29, %p30
    %p32 = scmp.ne.s32.totalorder %s21, %s24
    %p33 = scmp.eq.s32.totalorder %s16, 4
    %p34 = por %p32, %p33
    %p35 = scmp.ne.s32.totalorder %s24, %s25
    %p36 = scmp.eq.s32.totalorder %s16, 0
    %p37 = por %p35, %p36
    %p38 = scmp.ne.s32.totalorder %s24, %s25
    %p39 = scmp.eq.s32.totalorder %s17, 4
    %p40 = por %p38, %p39
    %p42 = scmp.ne.s32.totalorder %s25, %s41
    %p43 = scmp.eq.s32.totalorder %s17, 0
    %p44 = por %p42, %p43
    %s45 = ssub.s32 %s11, %s18
    %p46 = scmp.eq.s32.totalorder %s45, 0
    %s48 = sadd.s32 %s47, 1
    %s49 = scalar_select %p46, %s47, %s48
    %p52 = pneg %p46
    %p53 = scmp.eq.s32.totalorder %s11, 4
    %p54 = por %p52, %p53
    %p55 = scmp.ne.s32.totalorder %s47, %s50
    %p56 = scmp.eq.s32.totalorder %s11, 0
    %p57 = por %p55, %p56
    %p58 = scmp.ne.s32.totalorder %s47, %s50
    %p59 = scmp.eq.s32.totalorder %s16, 4
    %p60 = por %p58, %p59
    %p61 = scmp.ne.s32.totalorder %s50, %s51
    %p62 = scmp.eq.s32.totalorder %s16, 0
    %p63 = por %p61, %p62
    %p64 = scmp.ne.s32.totalorder %s50, %s51
    %p65 = scmp.eq.s32.totalorder %s17, 4
    %p66 = por %p64, %p65
    %p68 = scmp.ne.s32.totalorder %s51, %s67
    %p69 = scmp.eq.s32.totalorder %s17, 0
    %p70 = por %p68, %p69
    %s71 = ssub.s32 %s11, %s18
    %p72 = scmp.eq.s32.totalorder %s71, 0
    %s74 = sadd.s32 %s73, 1
    %s75 = scalar_select %p72, %s73, %s74
    %p78 = pneg %p72
    %p79 = scmp.eq.s32.totalorder %s11, 4
    %p80 = por %p78, %p79
    %p81 = scmp.ne.s32.totalorder %s73, %s76
    %p82 = scmp.eq.s32.totalorder %s11, 0
    %p83 = por %p81, %p82
    %p84 = scmp.ne.s32.totalorder %s73, %s76
    %p85 = scmp.eq.s32.totalorder %s16, 4
    %p86 = por %p84, %p85
    %p87 = scmp.ne.s32.totalorder %s76, %s77
    %p88 = scmp.eq.s32.totalorder %s16, 0
    %p89 = por %p87, %p88
    %p90 = scmp.ne.s32.totalorder %s76, %s77
    %p91 = scmp.eq.s32.totalorder %s17, 4
    %p92 = por %p90, %p91
    %p94 = scmp.ne.s32.totalorder %s77, %s93
    %p95 = scmp.eq.s32.totalorder %s17, 0
    %p96 = por %p94, %p95
    %s97 = ssub.s32 %s11, %s18
    %p98 = scmp.eq.s32.totalorder %s97, 0
    %s100 = sadd.s32 %s99, 1
    %s101 = scalar_select %p98, %s99, %s100
    %p104 = pneg %p98
    %p105 = scmp.eq.s32.totalorder %s11, 4
    %p106 = por %p104, %p105
    %p107 = scmp.ne.s32.totalorder %s99, %s102
    %p108 = scmp.eq.s32.totalorder %s11, 0
    %p109 = por %p107, %p108
    %p110 = scmp.ne.s32.totalorder %s99, %s102
    %p111 = scmp.eq.s32.totalorder %s16, 4
    %p112 = por %p110, %p111
    %p113 = scmp.ne.s32.totalorder %s102, %s103
    %p114 = scmp.eq.s32.totalorder %s16, 0
    %p115 = por %p113, %p114
    %p116 = scmp.ne.s32.totalorder %s102, %s103
    %p117 = scmp.eq.s32.totalorder %s17, 4
    %p118 = por %p116, %p117
    %p120 = scmp.ne.s32.totalorder %s103, %s119
    %p121 = scmp.eq.s32.totalorder %s17, 0
    %p122 = por %p120, %p121
    %s123 = ssub.s32 %s11, %s18
    %p124 = scmp.eq.s32.totalorder %s123, 0
    %s126 = sadd.s32 %s125, 1
    %s127 = scalar_select %p124, %s125, %s126
    %p130 = pneg %p124
    %p131 = scmp.eq.s32.totalorder %s11, 4
    %p132 = por %p130, %p131
    %p133 = scmp.ne.s32.totalorder %s125, %s128
    %p134 = scmp.eq.s32.totalorder %s11, 0
    %p135 = por %p133, %p134
    %p136 = scmp.ne.s32.totalorder %s125, %s128
    %p137 = scmp.eq.s32.totalorder %s16, 4
    %p138 = por %p136, %p137
    %p139 = scmp.ne.s32.totalorder %s128, %s129
    %p140 = scmp.eq.s32.totalorder %s16, 0
    %p141 = por %p139, %p140
    %p142 = scmp.ne.s32.totalorder %s128, %s129
    %p143 = scmp.eq.s32.totalorder %s17, 4
    %p144 = por %p142, %p143
    %p146 = scmp.ne.s32.totalorder %s129, %s145
    %p147 = scmp.eq.s32.totalorder %s17, 0
    %p148 = por %p146, %p147
    %s149 = ssub.s32 %s11, %s18
    %p150 = scmp.eq.s32.totalorder %s149, 0
    %s152 = sadd.s32 %s151, 1
    %s153 = scalar_select %p150, %s151, %s152
    %p156 = pneg %p150
    %p157 = scmp.eq.s32.totalorder %s11, 4
    %p158 = por %p156, %p157
    %p159 = scmp.ne.s32.totalorder %s151, %s154
    %p160 = scmp.eq.s32.totalorder %s11, 0
    %p161 = por %p159, %p160
    %p162 = scmp.ne.s32.totalorder %s151, %s154
    %p163 = scmp.eq.s32.totalorder %s16, 4
    %p164 = por %p162, %p163
    %p165 = scmp.ne.s32.totalorder %s154, %s155
    %p166 = scmp.eq.s32.totalorder %s16, 0
    %p167 = por %p165, %p166
    %p168 = scmp.ne.s32.totalorder %s154, %s155
    %p169 = scmp.eq.s32.totalorder %s17, 4
    %p170 = por %p168, %p169
    %p172 = scmp.ne.s32.totalorder %s155, %s171
    %p173 = scmp.eq.s32.totalorder %s17, 0
    %p174 = por %p172, %p173
    %p175 = scmp.le.s32.totalorder 1, %s11
    %p176 = scmp.lt.s32.totalorder %s11, 6
    %p177 = pnand %p175, %p176
    %p178 = pneg %p177
    // Predicated region
    $region9: #{model_forward.2} parent=5 // pred_check
      _
    $region10: #{model_forward.2} parent=5 // pred_check_branch
      %180 = sbr.rel (%p177) target = $region12
    $region11: #{model_forward.2} parent=5 // pred_region
      %s181 = ssub.s32 %s11, 1
    $region12: #{model_forward.2} parent=5 // pred_fallthru
      _
    %p182 = scmp.lt.s32.totalorder %s11, 5
    // Predicated region
    $region13: #{model_forward.2} parent=5 // pred_check
      %p183 = pneg %p182
    $region14: #{model_forward.2} parent=5 // pred_check_branch
      %185 = sbr.rel (%p183) target = $region16
    $region15: #{model_forward.2} parent=5 // pred_region
      // Predicated region
      $region17: #{model_forward.2} parent=15 // pred_check
        %p186 = pneg %p31
      $region18: #{model_forward.2} parent=15 // pred_check_branch
        %188 = sbr.rel (%p186) target = $region20
      $region19: #{model_forward.2} parent=15 // pred_region
        %p189 = scmp.lt.s32.totalorder %s11, 4
        %s190 = scalar_select %p189, %s11, 4
        %s191 = smul.addr %s190, 8
        %s192 = scalar_lea.vmem %s0, %s191
      $region20: #{model_forward.2} parent=15 // pred_fallthru
        _
      // Predicated region
      $region21: #{model_forward.2} parent=15 // pred_check
        %p193 = pneg %p57
      $region22: #{model_forward.2} parent=15 // pred_check_branch
        %195 = sbr.rel (%p193) target = $region24
      $region23: #{model_forward.2} parent=15 // pred_region
        %p196 = scmp.lt.s32.totalorder %s11, 4
        %s197 = scalar_select %p196, %s11, 4
        %s198 = smul.addr %s197, 2
        %s199 = smul.addr %s198, 8
        %s200 = scalar_lea.vmem %s1, %s199
      $region24: #{model_forward.2} parent=15 // pred_fallthru
        _
      // Predicated region
      $region25: #{model_forward.2} parent=15 // pred_check
        %p201 = pneg %p83
      $region26: #{model_forward.2} parent=15 // pred_check_branch
        %203 = sbr.rel (%p201) target = $region28
      $region27: #{model_forward.2} parent=15 // pred_region
        %p204 = scmp.lt.s32.totalorder %s11, 4
        %s205 = scalar_select %p204, %s11, 4
        %s206 = smul.addr %s205, 2
        %s207 = smul.addr %s206, 8
        %s208 = scalar_lea.vmem %s2, %s207
      $region28: #{model_forward.2} parent=15 // pred_fallthru
        _
      // Predicated region
      $region29: #{model_forward.2} parent=15 // pred_check
        %p209 = pneg %p109
      $region30: #{model_forward.2} parent=15 // pred_check_branch
        %211 = sbr.rel (%p209) target = $region32
      $region31: #{model_forward.2} parent=15 // pred_region
        %p212 = scmp.lt.s32.totalorder %s11, 4
        %s213 = scalar_select %p212, %s11, 4
        %s214 = smul.addr %s213, 8
        %s215 = scalar_lea.vmem %s3, %s214
      $region32: #{model_forward.2} parent=15 // pred_fallthru
        _
      // Predicated region
      $region33: #{model_forward.2} parent=15 // pred_check
        %p216 = pneg %p135
      $region34: #{model_forward.2} parent=15 // pred_check_branch
        %218 = sbr.rel (%p216) target = $region36
      $region35: #{model_forward.2} parent=15 // pred_region
        %p219 = scmp.lt.s32.totalorder %s11, 4
        %s220 = scalar_select %p219, %s11, 4
        %s221 = smul.addr %s220, 40
        %s222 = smul.addr %s221, 8
        %s223 = scalar_lea.vmem %s4, %s222
      $region36: #{model_forward.2} parent=15 // pred_fallthru
        _
    $region16: #{model_forward.2} parent=5 // pred_fallthru
      _
    %p224 = scmp.le.s32.totalorder 1, %s11
    %p225 = scmp.lt.s32.totalorder %s11, 6
    %p226 = pnand %p224, %p225
    %p227 = pneg %p226
    // Predicated region
    $region37: #{model_forward.2} parent=5 // pred_check
      _
    $region38: #{model_forward.2} parent=5 // pred_check_branch
      %229 = sbr.rel (%p226) target = $region40
    $region39: #{model_forward.2} parent=5 // pred_region
      %s230 = ssub.s32 %s11, 1
      %p231 = scmp.lt.s32.totalorder %s16, 4
      %s232 = scalar_select %p231, %s16, 4
      %s233 = smul.addr %s232, 8
      %s234 = scalar_lea.vmem %s0, %s233
      %p235 = pneg %p37
      %p236 = pneg %p34
      %p237 = scmp.lt.s32.totalorder %s16, 4
      %s238 = scalar_select %p237, %s16, 4
      %s239 = smul.addr %s238, 2
      %s240 = smul.addr %s239, 8
      %s241 = scalar_lea.vmem %s1, %s240
      %p242 = pneg %p63
      %p243 = pneg %p60
      %p244 = scmp.lt.s32.totalorder %s16, 4
      %s245 = scalar_select %p244, %s16, 4
      %s246 = smul.addr %s245, 2
      %s247 = smul.addr %s246, 8
      %s248 = scalar_lea.vmem %s2, %s247
      %p249 = pneg %p89
      %p250 = pneg %p86
      %p251 = scmp.lt.s32.totalorder %s16, 4
      %s252 = scalar_select %p251, %s16, 4
      %s253 = smul.addr %s252, 8
      %s254 = scalar_lea.vmem %s3, %s253
      %p255 = pneg %p115
      %p256 = pneg %p112
      %p257 = scmp.lt.s32.totalorder %s16, 4
      %s258 = scalar_select %p257, %s16, 4
      %s259 = smul.addr %s258, 40
      %s260 = smul.addr %s259, 8
      %s261 = scalar_lea.vmem %s4, %s260
      %p262 = pneg %p141
      %p263 = pneg %p138
      %p264 = pneg %p167
      %p265 = pneg %p164
      %p266 = scmp.lt.s32.totalorder %s16, 4
      %s267 = scalar_select %p266, %s16, 4
      %s268 = smul.addr %s267, 8
      %s269 = scalar_lea.vmem %s5, %s268
      %p270 = scmp.lt.s32.totalorder %s16, 4
      %s271 = scalar_select %p270, %s16, 4
      %s272 = smul.addr %s271, 8
      %s273 = scalar_lea.vmem %s0, %s272
      %p274 = scmp.lt.s32.totalorder %s16, 4
      %s275 = scalar_select %p274, %s16, 4
      %s276 = smul.addr %s275, 2
      %s277 = smul.addr %s276, 8
      %s278 = scalar_lea.vmem %s1, %s277
      %p279 = scmp.lt.s32.totalorder %s16, 4
      %s280 = scalar_select %p279, %s16, 4
      %s281 = smul.addr %s280, 2
      %s282 = smul.addr %s281, 8
      %s283 = scalar_lea.vmem %s2, %s282
      %p284 = scmp.lt.s32.totalorder %s16, 4
      %s285 = scalar_select %p284, %s16, 4
      %s286 = smul.addr %s285, 8
      %s287 = scalar_lea.vmem %s3, %s286
      %p288 = scmp.lt.s32.totalorder %s16, 4
      %s289 = scalar_select %p288, %s16, 4
      %s290 = smul.addr %s289, 40
      %s291 = smul.addr %s290, 8
      %s292 = scalar_lea.vmem %s4, %s291
      %p293 = scmp.lt.s32.totalorder %s16, 4
      %s294 = scalar_select %p293, %s16, 4
      %s295 = smul.addr %s294, 8
      %s296 = scalar_lea.vmem %s5, %s295
      %v297 = vld [vmem:[%s273] sm:$0xff]
      %v298 = vld [vmem:[%s278] sm:$0xff]
      %v299 = vld [vmem:[%s278 + $0x8] sm:$0xff]
      %v300 = vld [vmem:[%s283] sm:$0xff]
      %v301 = vld [vmem:[%s283 + $0x8] sm:$0xff]
      %v302 = vld [vmem:[%s287] sm:$0xff]
      %v303 = vld [vmem:[%s292] sm:$0xff]
      %v304 = vld [vmem:[%s292 + $0x8] sm:$0xff]
      %v305 = vld [vmem:[%s292 + $0x10] sm:$0xff]
      %v306 = vld [vmem:[%s292 + $0x18] sm:$0xff]
      %v307 = vld [vmem:[%s292 + $0x20] sm:$0xff]
      %v308 = vld [vmem:[%s292 + $0x28] sm:$0xff]
      %v309 = vld [vmem:[%s292 + $0x30] sm:$0xff]
      %v310 = vld [vmem:[%s292 + $0x38] sm:$0xff]
      %v311 = vld [vmem:[%s292 + $0x40] sm:$0xff]
      %v312 = vld [vmem:[%s292 + $0x48] sm:$0xff]
      %vm313 = vcmask 64512
      %v315 = vsel %vm313, %v300, 0
      %v318 = vsel %vm313, %v301, 0
      %320 = vmatpush.msra.mxu0 0.0
      %321 = vmatpush.msra.mxu0 0.0
      %322 = vmatpush.msra.mxu0 0.0
      %323 = vmatpush.msra.mxu0 0.0
      %324 = vmatpush.msra.mxu0 0.0
      %325 = vmatpush.msra.mxu0 0.0
      %326 = vmatpush.msra.mxu0 0.0
      %327 = vmatpush.msra.mxu0 0.0
      %328 = vmatpush.msra.mxu0 0.0
      %329 = vmatpush.msra.mxu0 0.0
      %330 = vmatpush.msra.mxu0 0.0
      %331 = vmatpush.msra.mxu0 0.0
      %332 = vmatpush.msra.mxu0 0.0
      %333 = vmatpush.msra.mxu0 0.0
      %334 = vmatpush.msra.mxu0 0.0
      %335 = vmatpush.msra.mxu0 %v297
      %336 = vmatmul.f32.gmra.mxu0 %v315
      %v337 = vpop.f32.mrf.mxu0
      %v338 = vadd.f32 0.0, %v337
      %339 = vmatmul.f32.gmra.mxu0 %v318
      %v340 = vpop.f32.mrf.mxu0
      %v341 = vadd.f32 0.0, %v340
      %342 = vdwg.mxu0
      %v343 = vperm.slane %v311, 0
      %v344 = vmul.f32 %v298, %v343
      %v345 = vmul.f32 %v299, %v343
      %v346 = vperm.slane %v311, 1
      %v347 = vadd.f32 %v344, %v346
      %v348 = vadd.f32 %v345, %v346
      %v349 = vperm.slane %v311, 2
      %v350 = vmul.f32 %v338, %v349
      %v351 = vmul.f32 %v341, %v349
      %v352 = vperm.slane %v311, 3
      %v353 = vadd.f32 %v350, %v352
      %v354 = vadd.f32 %v351, %v352
      %vm355 = vcmask 130048
      %v357 = vsel %vm355, %v353, 0
      %v360 = vsel %vm355, %v354, 0
      %362 = vmatpush.msra.mxu0 0.0
      %363 = vmatpush.msra.mxu0 0.0
      %364 = vmatpush.msra.mxu0 0.0
      %365 = vmatpush.msra.mxu0 0.0
      %366 = vmatpush.msra.mxu0 0.0
      %367 = vmatpush.msra.mxu0 0.0
      %368 = vmatpush.msra.mxu0 0.0
      %369 = vmatpush.msra.mxu0 0.0
      %370 = vmatpush.msra.mxu0 0.0
      %371 = vmatpush.msra.mxu0 0.0
      %372 = vmatpush.msra.mxu0 0.0
      %373 = vmatpush.msra.mxu0 0.0
      %374 = vmatpush.msra.mxu0 0.0
      %375 = vmatpush.msra.mxu0 0.0
      %376 = vmatpush.msra.mxu0 %v306
      %377 = vmatpush.msra.mxu0 %v305
      %378 = vmatmul.f32.gmra.mxu0 %v357
      %v379 = vpop.f32.mrf.mxu0
      %v380 = vadd.f32 0.0, %v379
      %381 = vmatmul.f32.gmra.mxu0 %v360
      %v382 = vpop.f32.mrf.mxu0
      %v383 = vadd.f32 0.0, %v382
      %384 = vdwg.mxu0
      %v386 = vsel %vm355, %v347, 0
      %v389 = vsel %vm355, %v348, 0
      %391 = vmatpush.msra.mxu0 0.0
      %392 = vmatpush.msra.mxu0 0.0
      %393 = vmatpush.msra.mxu0 0.0
      %394 = vmatpush.msra.mxu0 0.0
      %395 = vmatpush.msra.mxu0 0.0
      %396 = vmatpush.msra.mxu0 0.0
      %397 = vmatpush.msra.mxu0 0.0
      %398 = vmatpush.msra.mxu0 0.0
      %399 = vmatpush.msra.mxu0 0.0
      %400 = vmatpush.msra.mxu0 0.0
      %401 = vmatpush.msra.mxu0 0.0
      %402 = vmatpush.msra.mxu0 0.0
      %403 = vmatpush.msra.mxu0 0.0
      %404 = vmatpush.msra.mxu0 0.0
      %405 = vmatpush.msra.mxu0 %v304
      %406 = vmatpush.msra.mxu0 %v303
      %407 = vmatmul.f32.gmra.mxu0 %v386
      %v408 = vpop.f32.mrf.mxu0
      %v409 = vadd.f32 %v380, %v408
      %410 = vmatmul.f32.gmra.mxu0 %v389
      %v411 = vpop.f32.mrf.mxu0
      %v412 = vadd.f32 %v383, %v411
      %413 = vdwg.mxu0
      %v414 = vperm.slane %v312, 0
      %v415 = vadd.f32 %v409, %v414
      %v416 = vadd.f32 %v412, %v414
      %v417 = vmax.f32 %v415, 0.0
      %v418 = vmax.f32 %v416, 0.0
      %v420 = vsel %vm355, %v302, 0
      %422 = vmatpush.msra.mxu0 0.0
      %423 = vmatpush.msra.mxu0 0.0
      %424 = vmatpush.msra.mxu0 0.0
      %425 = vmatpush.msra.mxu0 0.0
      %426 = vmatpush.msra.mxu0 0.0
      %427 = vmatpush.msra.mxu0 0.0
      %428 = vmatpush.msra.mxu0 0.0
      %429 = vmatpush.msra.mxu0 0.0
      %430 = vmatpush.msra.mxu0 0.0
      %431 = vmatpush.msra.mxu0 0.0
      %432 = vmatpush.msra.mxu0 0.0
      %433 = vmatpush.msra.mxu0 0.0
      %434 = vmatpush.msra.mxu0 0.0
      %435 = vmatpush.msra.mxu0 0.0
      %436 = vmatpush.msra.mxu0 %v418
      %437 = vmatpush.msra.mxu0 %v417
      %438 = vmatmul.f32.gmra.mxu0 %v420
      %v439 = vpop.f32.mrf.mxu0
      %v440 = vadd.f32 0.0, %v439
      %441 = vdwg.mxu0
      %v442 = vperm.slane %v311, 4
      %v443 = vmul.f32 %v440, %v442
      %v444 = vperm.slane %v311, 5
      %v445 = vadd.f32 %v443, %v444
      %v446 = vperm.slane %v311, 6
      %v447 = vmul.f32 %v297, %v446
      %v448 = vperm.slane %v311, 7
      %v449 = vadd.f32 %v447, %v448
      %v451 = vsel %vm355, %v449, 0
      %453 = vmatpush.msra.mxu0 0.0
      %454 = vmatpush.msra.mxu0 0.0
      %455 = vmatpush.msra.mxu0 0.0
      %456 = vmatpush.msra.mxu0 0.0
      %457 = vmatpush.msra.mxu0 0.0
      %458 = vmatpush.msra.mxu0 0.0
      %459 = vmatpush.msra.mxu0 0.0
      %460 = vmatpush.msra.mxu0 0.0
      %461 = vmatpush.msra.mxu0 0.0
      %462 = vmatpush.msra.mxu0 0.0
      %463 = vmatpush.msra.mxu0 0.0
      %464 = vmatpush.msra.mxu0 0.0
      %465 = vmatpush.msra.mxu0 0.0
      %466 = vmatpush.msra.mxu0 0.0
      %467 = vmatpush.msra.mxu0 %v310
      %468 = vmatpush.msra.mxu0 %v309
      %469 = vmatmul.f32.gmra.mxu0 %v451
      %v470 = vpop.f32.mrf.mxu0
      %v471 = vadd.f32 0.0, %v470
      %472 = vdwg.mxu0
      %v474 = vsel %vm355, %v445, 0
      %476 = vmatpush.msra.mxu0 0.0
      %477 = vmatpush.msra.mxu0 0.0
      %478 = vmatpush.msra.mxu0 0.0
      %479 = vmatpush.msra.mxu0 0.0
      %480 = vmatpush.msra.mxu0 0.0
      %481 = vmatpush.msra.mxu0 0.0
      %482 = vmatpush.msra.mxu0 0.0
      %483 = vmatpush.msra.mxu0 0.0
      %484 = vmatpush.msra.mxu0 0.0
      %485 = vmatpush.msra.mxu0 0.0
      %486 = vmatpush.msra.mxu0 0.0
      %487 = vmatpush.msra.mxu0 0.0
      %488 = vmatpush.msra.mxu0 0.0
      %489 = vmatpush.msra.mxu0 0.0
      %490 = vmatpush.msra.mxu0 %v308
      %491 = vmatpush.msra.mxu0 %v307
      %492 = vmatmul.f32.gmra.mxu0 %v474
      %v493 = vpop.f32.mrf.mxu0
      %v494 = vadd.f32 %v471, %v493
      %495 = vdwg.mxu0
      %v496 = vperm.slane %v312, 1
      %v497 = vadd.f32 %v494, %v496
      %v498 = vmax.f32 %v497, 0.0
      %s499 = scalar_lea.vmem %s292, 80
      %v500 = vld [vmem:[%s499] sm:$0xff]
      %v501 = vld [vmem:[%s499 + $0x8] sm:$0xff]
      %v502 = vld [vmem:[%s499 + $0x10] sm:$0xff]
      %v503 = vld [vmem:[%s499 + $0x18] sm:$0xff]
      %v504 = vld [vmem:[%s499 + $0x20] sm:$0xff]
      %v505 = vld [vmem:[%s499 + $0x28] sm:$0xff]
      %v506 = vld [vmem:[%s499 + $0x30] sm:$0xff]
      %v507 = vld [vmem:[%s499 + $0x38] sm:$0xff]
      %v508 = vld [vmem:[%s499 + $0x40] sm:$0xff]
      %v509 = vld [vmem:[%s499 + $0x48] sm:$0xff]
      %510 = vmatpush.msra.mxu0 0.0
      %511 = vmatpush.msra.mxu0 0.0
      %512 = vmatpush.msra.mxu0 0.0
      %513 = vmatpush.msra.mxu0 0.0
      %514 = vmatpush.msra.mxu0 0.0
      %515 = vmatpush.msra.mxu0 0.0
      %516 = vmatpush.msra.mxu0 0.0
      %517 = vmatpush.msra.mxu0 0.0
      %518 = vmatpush.msra.mxu0 0.0
      %519 = vmatpush.msra.mxu0 0.0
      %520 = vmatpush.msra.mxu0 0.0
      %521 = vmatpush.msra.mxu0 0.0
      %522 = vmatpush.msra.mxu0 0.0
      %523 = vmatpush.msra.mxu0 0.0
      %524 = vmatpush.msra.mxu0 0.0
      %525 = vmatpush.msra.mxu0 %v498
      %526 = vmatmul.f32.gmra.mxu0 %v315
      %v527 = vpop.f32.mrf.mxu0
      %v528 = vadd.f32 0.0, %v527
      %529 = vmatmul.f32.gmra.mxu0 %v318
      %v530 = vpop.f32.mrf.mxu0
      %v531 = vadd.f32 0.0, %v530
      %532 = vdwg.mxu0
      %v533 = vperm.slane %v508, 0
      %v534 = vmul.f32 %v298, %v533
      %v535 = vmul.f32 %v299, %v533
      %v536 = vperm.slane %v508, 1
      %v537 = vadd.f32 %v534, %v536
      %v538 = vadd.f32 %v535, %v536
      %v539 = vperm.slane %v508, 2
      %v540 = vmul.f32 %v528, %v539
      %v541 = vmul.f32 %v531, %v539
      %v542 = vperm.slane %v508, 3
      %v543 = vadd.f32 %v540, %v542
      %v544 = vadd.f32 %v541, %v542
      %v546 = vsel %vm355, %v543, 0
      %v549 = vsel %vm355, %v544, 0
      %551 = vmatpush.msra.mxu0 0.0
      %552 = vmatpush.msra.mxu0 0.0
      %553 = vmatpush.msra.mxu0 0.0
      %554 = vmatpush.msra.mxu0 0.0
      %555 = vmatpush.msra.mxu0 0.0
      %556 = vmatpush.msra.mxu0 0.0
      %557 = vmatpush.msra.mxu0 0.0
      %558 = vmatpush.msra.mxu0 0.0
      %559 = vmatpush.msra.mxu0 0.0
      %560 = vmatpush.msra.mxu0 0.0
      %561 = vmatpush.msra.mxu0 0.0
      %562 = vmatpush.msra.mxu0 0.0
      %563 = vmatpush.msra.mxu0 0.0
      %564 = vmatpush.msra.mxu0 0.0
      %565 = vmatpush.msra.mxu0 %v503
      %566 = vmatpush.msra.mxu0 %v502
      %567 = vmatmul.f32.gmra.mxu0 %v546
      %v568 = vpop.f32.mrf.mxu0
      %v569 = vadd.f32 0.0, %v568
      %570 = vmatmul.f32.gmra.mxu0 %v549
      %v571 = vpop.f32.mrf.mxu0
      %v572 = vadd.f32 0.0, %v571
      %573 = vdwg.mxu0
      %v575 = vsel %vm355, %v537, 0
      %v578 = vsel %vm355, %v538, 0
      %580 = vmatpush.msra.mxu0 0.0
      %581 = vmatpush.msra.mxu0 0.0
      %582 = vmatpush.msra.mxu0 0.0
      %583 = vmatpush.msra.mxu0 0.0
      %584 = vmatpush.msra.mxu0 0.0
      %585 = vmatpush.msra.mxu0 0.0
      %586 = vmatpush.msra.mxu0 0.0
      %587 = vmatpush.msra.mxu0 0.0
      %588 = vmatpush.msra.mxu0 0.0
      %589 = vmatpush.msra.mxu0 0.0
      %590 = vmatpush.msra.mxu0 0.0
      %591 = vmatpush.msra.mxu0 0.0
      %592 = vmatpush.msra.mxu0 0.0
      %593 = vmatpush.msra.mxu0 0.0
      %594 = vmatpush.msra.mxu0 %v501
      %595 = vmatpush.msra.mxu0 %v500
      %596 = vmatmul.f32.gmra.mxu0 %v575
      %v597 = vpop.f32.mrf.mxu0
      %v598 = vadd.f32 %v569, %v597
      %599 = vmatmul.f32.gmra.mxu0 %v578
      %v600 = vpop.f32.mrf.mxu0
      %v601 = vadd.f32 %v572, %v600
      %602 = vdwg.mxu0
      %v603 = vperm.slane %v509, 0
      %v604 = vadd.f32 %v598, %v603
      %v605 = vadd.f32 %v601, %v603
      %v606 = vmax.f32 %v604, 0.0
      %v607 = vmax.f32 %v605, 0.0
      %608 = vmatpush.msra.mxu0 0.0
      %609 = vmatpush.msra.mxu0 0.0
      %610 = vmatpush.msra.mxu0 0.0
      %611 = vmatpush.msra.mxu0 0.0
      %612 = vmatpush.msra.mxu0 0.0
      %613 = vmatpush.msra.mxu0 0.0
      %614 = vmatpush.msra.mxu0 0.0
      %615 = vmatpush.msra.mxu0 0.0
      %616 = vmatpush.msra.mxu0 0.0
      %617 = vmatpush.msra.mxu0 0.0
      %618 = vmatpush.msra.mxu0 0.0
      %619 = vmatpush.msra.mxu0 0.0
      %620 = vmatpush.msra.mxu0 0.0
      %621 = vmatpush.msra.mxu0 0.0
      %622 = vmatpush.msra.mxu0 %v607
      %623 = vmatpush.msra.mxu0 %v606
      %624 = vmatmul.f32.gmra.mxu0 %v420
      %v625 = vpop.f32.mrf.mxu0
      %v626 = vadd.f32 0.0, %v625
      %627 = vdwg.mxu0
      %v628 = vperm.slane %v508, 4
      %v629 = vmul.f32 %v626, %v628
      %v630 = vperm.slane %v508, 5
      %v631 = vadd.f32 %v629, %v630
      %v632 = vperm.slane %v508, 6
      %v633 = vmul.f32 %v498, %v632
      %v634 = vperm.slane %v508, 7
      %v635 = vadd.f32 %v633, %v634
      %v637 = vsel %vm355, %v635, 0
      %639 = vmatpush.msra.mxu0 0.0
      %640 = vmatpush.msra.mxu0 0.0
      %641 = vmatpush.msra.mxu0 0.0
      %642 = vmatpush.msra.mxu0 0.0
      %643 = vmatpush.msra.mxu0 0.0
      %644 = vmatpush.msra.mxu0 0.0
      %645 = vmatpush.msra.mxu0 0.0
      %646 = vmatpush.msra.mxu0 0.0
      %647 = vmatpush.msra.mxu0 0.0
      %648 = vmatpush.msra.mxu0 0.0
      %649 = vmatpush.msra.mxu0 0.0
      %650 = vmatpush.msra.mxu0 0.0
      %651 = vmatpush.msra.mxu0 0.0
      %652 = vmatpush.msra.mxu0 0.0
      %653 = vmatpush.msra.mxu0 %v507
      %654 = vmatpush.msra.mxu0 %v506
      %655 = vmatmul.f32.gmra.mxu0 %v637
      %v656 = vpop.f32.mrf.mxu0
      %v657 = vadd.f32 0.0, %v656
      %658 = vdwg.mxu0
      %v660 = vsel %vm355, %v631, 0
      %662 = vmatpush.msra.mxu0 0.0
      %663 = vmatpush.msra.mxu0 0.0
      %664 = vmatpush.msra.mxu0 0.0
      %665 = vmatpush.msra.mxu0 0.0
      %666 = vmatpush.msra.mxu0 0.0
      %667 = vmatpush.msra.mxu0 0.0
      %668 = vmatpush.msra.mxu0 0.0
      %669 = vmatpush.msra.mxu0 0.0
      %670 = vmatpush.msra.mxu0 0.0
      %671 = vmatpush.msra.mxu0 0.0
      %672 = vmatpush.msra.mxu0 0.0
      %673 = vmatpush.msra.mxu0 0.0
      %674 = vmatpush.msra.mxu0 0.0
      %675 = vmatpush.msra.mxu0 0.0
      %676 = vmatpush.msra.mxu0 %v505
      %677 = vmatpush.msra.mxu0 %v504
      %678 = vmatmul.f32.gmra.mxu0 %v660
      %v679 = vpop.f32.mrf.mxu0
      %v680 = vadd.f32 %v657, %v679
      %681 = vdwg.mxu0
      %v682 = vperm.slane %v509, 1
      %v683 = vadd.f32 %v680, %v682
      %v684 = vmax.f32 %v683, 0.0
      %s685 = scalar_lea.vmem %s292, 160
      %v686 = vld [vmem:[%s685] sm:$0xff]
      %v687 = vld [vmem:[%s685 + $0x8] sm:$0xff]
      %v688 = vld [vmem:[%s685 + $0x10] sm:$0xff]
      %v689 = vld [vmem:[%s685 + $0x18] sm:$0xff]
      %v690 = vld [vmem:[%s685 + $0x20] sm:$0xff]
      %v691 = vld [vmem:[%s685 + $0x28] sm:$0xff]
      %v692 = vld [vmem:[%s685 + $0x30] sm:$0xff]
      %v693 = vld [vmem:[%s685 + $0x38] sm:$0xff]
      %v694 = vld [vmem:[%s685 + $0x40] sm:$0xff]
      %v695 = vld [vmem:[%s685 + $0x48] sm:$0xff]
      %696 = vmatpush.msra.mxu0 0.0
      %697 = vmatpush.msra.mxu0 0.0
      %698 = vmatpush.msra.mxu0 0.0
      %699 = vmatpush.msra.mxu0 0.0
      %700 = vmatpush.msra.mxu0 0.0
      %701 = vmatpush.msra.mxu0 0.0
      %702 = vmatpush.msra.mxu0 0.0
      %703 = vmatpush.msra.mxu0 0.0
      %704 = vmatpush.msra.mxu0 0.0
      %705 = vmatpush.msra.mxu0 0.0
      %706 = vmatpush.msra.mxu0 0.0
      %707 = vmatpush.msra.mxu0 0.0
      %708 = vmatpush.msra.mxu0 0.0
      %709 = vmatpush.msra.mxu0 0.0
      %710 = vmatpush.msra.mxu0 0.0
      %711 = vmatpush.msra.mxu0 %v684
      %712 = vmatmul.f32.gmra.mxu0 %v315
      %v713 = vpop.f32.mrf.mxu0
      %v714 = vadd.f32 0.0, %v713
      %715 = vmatmul.f32.gmra.mxu0 %v318
      %v716 = vpop.f32.mrf.mxu0
      %v717 = vadd.f32 0.0, %v716
      %718 = vdwg.mxu0
      %v719 = vperm.slane %v694, 0
      %v720 = vmul.f32 %v298, %v719
      %v721 = vmul.f32 %v299, %v719
      %v722 = vperm.slane %v694, 1
      %v723 = vadd.f32 %v720, %v722
      %v724 = vadd.f32 %v721, %v722
      %v725 = vperm.slane %v694, 2
      %v726 = vmul.f32 %v714, %v725
      %v727 = vmul.f32 %v717, %v725
      %v728 = vperm.slane %v694, 3
      %v729 = vadd.f32 %v726, %v728
      %v730 = vadd.f32 %v727, %v728
      %v732 = vsel %vm355, %v729, 0
      %v735 = vsel %vm355, %v730, 0
      %737 = vmatpush.msra.mxu0 0.0
      %738 = vmatpush.msra.mxu0 0.0
      %739 = vmatpush.msra.mxu0 0.0
      %740 = vmatpush.msra.mxu0 0.0
      %741 = vmatpush.msra.mxu0 0.0
      %742 = vmatpush.msra.mxu0 0.0
      %743 = vmatpush.msra.mxu0 0.0
      %744 = vmatpush.msra.mxu0 0.0
      %745 = vmatpush.msra.mxu0 0.0
      %746 = vmatpush.msra.mxu0 0.0
      %747 = vmatpush.msra.mxu0 0.0
      %748 = vmatpush.msra.mxu0 0.0
      %749 = vmatpush.msra.mxu0 0.0
      %750 = vmatpush.msra.mxu0 0.0
      %751 = vmatpush.msra.mxu0 %v689
      %752 = vmatpush.msra.mxu0 %v688
      %753 = vmatmul.f32.gmra.mxu0 %v732
      %v754 = vpop.f32.mrf.mxu0
      %v755 = vadd.f32 0.0, %v754
      %756 = vmatmul.f32.gmra.mxu0 %v735
      %v757 = vpop.f32.mrf.mxu0
      %v758 = vadd.f32 0.0, %v757
      %759 = vdwg.mxu0
      %v761 = vsel %vm355, %v723, 0
      %v764 = vsel %vm355, %v724, 0
      %766 = vmatpush.msra.mxu0 0.0
      %767 = vmatpush.msra.mxu0 0.0
      %768 = vmatpush.msra.mxu0 0.0
      %769 = vmatpush.msra.mxu0 0.0
      %770 = vmatpush.msra.mxu0 0.0
      %771 = vmatpush.msra.mxu0 0.0
      %772 = vmatpush.msra.mxu0 0.0
      %773 = vmatpush.msra.mxu0 0.0
      %774 = vmatpush.msra.mxu0 0.0
      %775 = vmatpush.msra.mxu0 0.0
      %776 = vmatpush.msra.mxu0 0.0
      %777 = vmatpush.msra.mxu0 0.0
      %778 = vmatpush.msra.mxu0 0.0
      %779 = vmatpush.msra.mxu0 0.0
      %780 = vmatpush.msra.mxu0 %v687
      %781 = vmatpush.msra.mxu0 %v686
      %782 = vmatmul.f32.gmra.mxu0 %v761
      %v783 = vpop.f32.mrf.mxu0
      %v784 = vadd.f32 %v755, %v783
      %785 = vmatmul.f32.gmra.mxu0 %v764
      %v786 = vpop.f32.mrf.mxu0
      %v787 = vadd.f32 %v758, %v786
      %788 = vdwg.mxu0
      %v789 = vperm.slane %v695, 0
      %v790 = vadd.f32 %v784, %v789
      %v791 = vadd.f32 %v787, %v789
      %v792 = vmax.f32 %v790, 0.0
      %v793 = vmax.f32 %v791, 0.0
      %794 = vmatpush.msra.mxu0 0.0
      %795 = vmatpush.msra.mxu0 0.0
      %796 = vmatpush.msra.mxu0 0.0
      %797 = vmatpush.msra.mxu0 0.0
      %798 = vmatpush.msra.mxu0 0.0
      %799 = vmatpush.msra.mxu0 0.0
      %800 = vmatpush.msra.mxu0 0.0
      %801 = vmatpush.msra.mxu0 0.0
      %802 = vmatpush.msra.mxu0 0.0
      %803 = vmatpush.msra.mxu0 0.0
      %804 = vmatpush.msra.mxu0 0.0
      %805 = vmatpush.msra.mxu0 0.0
      %806 = vmatpush.msra.mxu0 0.0
      %807 = vmatpush.msra.mxu0 0.0
      %808 = vmatpush.msra.mxu0 %v793
      %809 = vmatpush.msra.mxu0 %v792
      %810 = vmatmul.f32.gmra.mxu0 %v420
      %v811 = vpop.f32.mrf.mxu0
      %v812 = vadd.f32 0.0, %v811
      %813 = vdwg.mxu0
      %v814 = vperm.slane %v694, 4
      %v815 = vmul.f32 %v812, %v814
      %v816 = vperm.slane %v694, 5
      %v817 = vadd.f32 %v815, %v816
      %v818 = vperm.slane %v694, 6
      %v819 = vmul.f32 %v684, %v818
      %v820 = vperm.slane %v694, 7
      %v821 = vadd.f32 %v819, %v820
      %v823 = vsel %vm355, %v821, 0
      %825 = vmatpush.msra.mxu0 0.0
      %826 = vmatpush.msra.mxu0 0.0
      %827 = vmatpush.msra.mxu0 0.0
      %828 = vmatpush.msra.mxu0 0.0
      %829 = vmatpush.msra.mxu0 0.0
      %830 = vmatpush.msra.mxu0 0.0
      %831 = vmatpush.msra.mxu0 0.0
      %832 = vmatpush.msra.mxu0 0.0
      %833 = vmatpush.msra.mxu0 0.0
      %834 = vmatpush.msra.mxu0 0.0
      %835 = vmatpush.msra.mxu0 0.0
      %836 = vmatpush.msra.mxu0 0.0
      %837 = vmatpush.msra.mxu0 0.0
      %838 = vmatpush.msra.mxu0 0.0
      %839 = vmatpush.msra.mxu0 %v693
      %840 = vmatpush.msra.mxu0 %v692
      %841 = vmatmul.f32.gmra.mxu0 %v823
      %v842 = vpop.f32.mrf.mxu0
      %v843 = vadd.f32 0.0, %v842
      %844 = vdwg.mxu0
      %v846 = vsel %vm355, %v817, 0
      %848 = vmatpush.msra.mxu0 0.0
      %849 = vmatpush.msra.mxu0 0.0
      %850 = vmatpush.msra.mxu0 0.0
      %851 = vmatpush.msra.mxu0 0.0
      %852 = vmatpush.msra.mxu0 0.0
      %853 = vmatpush.msra.mxu0 0.0
      %854 = vmatpush.msra.mxu0 0.0
      %855 = vmatpush.msra.mxu0 0.0
      %856 = vmatpush.msra.mxu0 0.0
      %857 = vmatpush.msra.mxu0 0.0
      %858 = vmatpush.msra.mxu0 0.0
      %859 = vmatpush.msra.mxu0 0.0
      %860 = vmatpush.msra.mxu0 0.0
      %861 = vmatpush.msra.mxu0 0.0
      %862 = vmatpush.msra.mxu0 %v691
      %863 = vmatpush.msra.mxu0 %v690
      %864 = vmatmul.f32.gmra.mxu0 %v846
      %v865 = vpop.f32.mrf.mxu0
      %v866 = vadd.f32 %v843, %v865
      %867 = vdwg.mxu0
      %v868 = vperm.slane %v695, 1
      %v869 = vadd.f32 %v866, %v868
      %v870 = vmax.f32 %v869, 0.0
      %s871 = scalar_lea.vmem %s292, 240
      %v872 = vld [vmem:[%s871] sm:$0xff]
      %v873 = vld [vmem:[%s871 + $0x8] sm:$0xff]
      %v874 = vld [vmem:[%s871 + $0x10] sm:$0xff]
      %v875 = vld [vmem:[%s871 + $0x18] sm:$0xff]
      %v876 = vld [vmem:[%s871 + $0x20] sm:$0xff]
      %v877 = vld [vmem:[%s871 + $0x28] sm:$0xff]
      %v878 = vld [vmem:[%s871 + $0x30] sm:$0xff]
      %v879 = vld [vmem:[%s871 + $0x38] sm:$0xff]
      %v880 = vld [vmem:[%s871 + $0x40] sm:$0xff]
      %v881 = vld [vmem:[%s871 + $0x48] sm:$0xff]
      %882 = vmatpush.msra.mxu0 0.0
      %883 = vmatpush.msra.mxu0 0.0
      %884 = vmatpush.msra.mxu0 0.0
      %885 = vmatpush.msra.mxu0 0.0
      %886 = vmatpush.msra.mxu0 0.0
      %887 = vmatpush.msra.mxu0 0.0
      %888 = vmatpush.msra.mxu0 0.0
      %889 = vmatpush.msra.mxu0 0.0
      %890 = vmatpush.msra.mxu0 0.0
      %891 = vmatpush.msra.mxu0 0.0
      %892 = vmatpush.msra.mxu0 0.0
      %893 = vmatpush.msra.mxu0 0.0
      %894 = vmatpush.msra.mxu0 0.0
      %895 = vmatpush.msra.mxu0 0.0
      %896 = vmatpush.msra.mxu0 0.0
      %897 = vmatpush.msra.mxu0 %v870
      %898 = vmatmul.f32.gmra.mxu0 %v315
      %v899 = vpop.f32.mrf.mxu0
      %v900 = vadd.f32 0.0, %v899
      %901 = vmatmul.f32.gmra.mxu0 %v318
      %v902 = vpop.f32.mrf.mxu0
      %v903 = vadd.f32 0.0, %v902
      %904 = vdwg.mxu0
      %v905 = vperm.slane %v880, 0
      %v906 = vmul.f32 %v298, %v905
      %v907 = vmul.f32 %v299, %v905
      %v908 = vperm.slane %v880, 1
      %v909 = vadd.f32 %v906, %v908
      %v910 = vadd.f32 %v907, %v908
      %v911 = vperm.slane %v880, 2
      %v912 = vmul.f32 %v900, %v911
      %v913 = vmul.f32 %v903, %v911
      %v914 = vperm.slane %v880, 3
      %v915 = vadd.f32 %v912, %v914
      %v916 = vadd.f32 %v913, %v914
      %v918 = vsel %vm355, %v915, 0
      %v921 = vsel %vm355, %v916, 0
      %923 = vmatpush.msra.mxu0 0.0
      %924 = vmatpush.msra.mxu0 0.0
      %925 = vmatpush.msra.mxu0 0.0
      %926 = vmatpush.msra.mxu0 0.0
      %927 = vmatpush.msra.mxu0 0.0
      %928 = vmatpush.msra.mxu0 0.0
      %929 = vmatpush.msra.mxu0 0.0
      %930 = vmatpush.msra.mxu0 0.0
      %931 = vmatpush.msra.mxu0 0.0
      %932 = vmatpush.msra.mxu0 0.0
      %933 = vmatpush.msra.mxu0 0.0
      %934 = vmatpush.msra.mxu0 0.0
      %935 = vmatpush.msra.mxu0 0.0
      %936 = vmatpush.msra.mxu0 0.0
      %937 = vmatpush.msra.mxu0 %v875
      %938 = vmatpush.msra.mxu0 %v874
      %939 = vmatmul.f32.gmra.mxu0 %v918
      %v940 = vpop.f32.mrf.mxu0
      %v941 = vadd.f32 0.0, %v940
      %942 = vmatmul.f32.gmra.mxu0 %v921
      %v943 = vpop.f32.mrf.mxu0
      %v944 = vadd.f32 0.0, %v943
      %945 = vdwg.mxu0
      %v947 = vsel %vm355, %v909, 0
      %v950 = vsel %vm355, %v910, 0
      %952 = vmatpush.msra.mxu0 0.0
      %953 = vmatpush.msra.mxu0 0.0
      %954 = vmatpush.msra.mxu0 0.0
      %955 = vmatpush.msra.mxu0 0.0
      %956 = vmatpush.msra.mxu0 0.0
      %957 = vmatpush.msra.mxu0 0.0
      %958 = vmatpush.msra.mxu0 0.0
      %959 = vmatpush.msra.mxu0 0.0
      %960 = vmatpush.msra.mxu0 0.0
      %961 = vmatpush.msra.mxu0 0.0
      %962 = vmatpush.msra.mxu0 0.0
      %963 = vmatpush.msra.mxu0 0.0
      %964 = vmatpush.msra.mxu0 0.0
      %965 = vmatpush.msra.mxu0 0.0
      %966 = vmatpush.msra.mxu0 %v873
      %967 = vmatpush.msra.mxu0 %v872
      %968 = vmatmul.f32.gmra.mxu0 %v947
      %v969 = vpop.f32.mrf.mxu0
      %v970 = vadd.f32 %v941, %v969
      %971 = vmatmul.f32.gmra.mxu0 %v950
      %v972 = vpop.f32.mrf.mxu0
      %v973 = vadd.f32 %v944, %v972
      %974 = vdwg.mxu0
      %v975 = vperm.slane %v881, 0
      %v976 = vadd.f32 %v970, %v975
      %v977 = vadd.f32 %v973, %v975
      %v978 = vmax.f32 %v976, 0.0
      %v979 = vmax.f32 %v977, 0.0
      %980 = vmatpush.msra.mxu0 0.0
      %981 = vmatpush.msra.mxu0 0.0
      %982 = vmatpush.msra.mxu0 0.0
      %983 = vmatpush.msra.mxu0 0.0
      %984 = vmatpush.msra.mxu0 0.0
      %985 = vmatpush.msra.mxu0 0.0
      %986 = vmatpush.msra.mxu0 0.0
      %987 = vmatpush.msra.mxu0 0.0
      %988 = vmatpush.msra.mxu0 0.0
      %989 = vmatpush.msra.mxu0 0.0
      %990 = vmatpush.msra.mxu0 0.0
      %991 = vmatpush.msra.mxu0 0.0
      %992 = vmatpush.msra.mxu0 0.0
      %993 = vmatpush.msra.mxu0 0.0
      %994 = vmatpush.msra.mxu0 %v979
      %995 = vmatpush.msra.mxu0 %v978
      %996 = vmatmul.f32.gmra.mxu0 %v420
      %v997 = vpop.f32.mrf.mxu0
      %v998 = vadd.f32 0.0, %v997
      %999 = vdwg.mxu0
      %v1000 = vperm.slane %v880, 4
      %v1001 = vmul.f32 %v998, %v1000
      %v1002 = vperm.slane %v880, 5
      %v1003 = vadd.f32 %v1001, %v1002
      %v1004 = vperm.slane %v880, 6
      %v1005 = vmul.f32 %v870, %v1004
      %v1006 = vperm.slane %v880, 7
      %v1007 = vadd.f32 %v1005, %v1006
      %v1009 = vsel %vm355, %v1007, 0
      %1011 = vmatpush.msra.mxu0 0.0
      %1012 = vmatpush.msra.mxu0 0.0
      %1013 = vmatpush.msra.mxu0 0.0
      %1014 = vmatpush.msra.mxu0 0.0
      %1015 = vmatpush.msra.mxu0 0.0
      %1016 = vmatpush.msra.mxu0 0.0
      %1017 = vmatpush.msra.mxu0 0.0
      %1018 = vmatpush.msra.mxu0 0.0
      %1019 = vmatpush.msra.mxu0 0.0
      %1020 = vmatpush.msra.mxu0 0.0
      %1021 = vmatpush.msra.mxu0 0.0
      %1022 = vmatpush.msra.mxu0 0.0
      %1023 = vmatpush.msra.mxu0 0.0
      %1024 = vmatpush.msra.mxu0 0.0
      %1025 = vmatpush.msra.mxu0 %v879
      %1026 = vmatpush.msra.mxu0 %v878
      %1027 = vmatmul.f32.gmra.mxu0 %v1009
      %v1028 = vpop.f32.mrf.mxu0
      %v1029 = vadd.f32 0.0, %v1028
      %1030 = vdwg.mxu0
      %v1032 = vsel %vm355, %v1003, 0
      %1034 = vmatpush.msra.mxu0 0.0
      %1035 = vmatpush.msra.mxu0 0.0
      %1036 = vmatpush.msra.mxu0 0.0
      %1037 = vmatpush.msra.mxu0 0.0
      %1038 = vmatpush.msra.mxu0 0.0
      %1039 = vmatpush.msra.mxu0 0.0
      %1040 = vmatpush.msra.mxu0 0.0
      %1041 = vmatpush.msra.mxu0 0.0
      %1042 = vmatpush.msra.mxu0 0.0
      %1043 = vmatpush.msra.mxu0 0.0
      %1044 = vmatpush.msra.mxu0 0.0
      %1045 = vmatpush.msra.mxu0 0.0
      %1046 = vmatpush.msra.mxu0 0.0
      %1047 = vmatpush.msra.mxu0 0.0
      %1048 = vmatpush.msra.mxu0 %v877
      %1049 = vmatpush.msra.mxu0 %v876
      %1050 = vmatmul.f32.gmra.mxu0 %v1032
      %v1051 = vpop.f32.mrf.mxu0
      %v1052 = vadd.f32 %v1029, %v1051
      %1053 = vdwg.mxu0
      %v1054 = vperm.slane %v881, 1
      %v1055 = vadd.f32 %v1052, %v1054
      %v1056 = vmax.f32 %v1055, 0.0
      %1057 = vst.msk [vmem:[%s296] sm:$0xff] %vm355, %v1056
      %p1058 = scmp.lt.s32.totalorder %s16, 4
      %s1059 = scalar_select %p1058, %s16, 4
      %s1060 = smul.addr %s1059, 8
      %s1061 = scalar_lea.vmem %s5, %s1060
      // Predicated region
      $region41: #{model_forward.2} parent=39 // pred_check
        %p1062 = pneg %p164
      $region42: #{model_forward.2} parent=39 // pred_check_branch
        %1064 = sbr.rel (%p1062) target = $region44
      $region43: #{model_forward.2} parent=39 // pred_region
        _
      $region44: #{model_forward.2} parent=39 // pred_fallthru
        _
    $region40: #{model_forward.2} parent=5 // pred_fallthru
      _
    %p1065 = scmp.le.s32.totalorder 2, %s11
    // Predicated region
    $region45: #{model_forward.2} parent=5 // pred_check
      %p1066 = pneg %p1065
    $region46: #{model_forward.2} parent=5 // pred_check_branch
      %1068 = sbr.rel (%p1066) target = $region48
    $region47: #{model_forward.2} parent=5 // pred_region
      %s1069 = ssub.s32 %s11, 2
      // Predicated region
      $region49: #{model_forward.2} parent=47 // pred_check
        %p1070 = pneg %p170
      $region50: #{model_forward.2} parent=47 // pred_check_branch
        %1072 = sbr.rel (%p1070) target = $region52
      $region51: #{model_forward.2} parent=47 // pred_region
        %p1073 = scmp.lt.s32.totalorder %s17, 4
        %s1074 = scalar_select %p1073, %s17, 4
        %s1075 = smul.addr %s1074, 8
        %s1076 = scalar_lea.vmem %s5, %s1075
      $region52: #{model_forward.2} parent=47 // pred_fallthru
        _
    $region48: #{model_forward.2} parent=5 // pred_fallthru
      _
  $region6: #{model_forward.2} parent=0 // loop_footer
    %s15 = sadd.s32 1, %s11
  $region7: #{model_forward.2} parent=0 // loop_footer_branch
    %10 = sbr.rel target = $region3
  $region8: #{model_forward.2} parent=0 // loop_exit
    _

</llo_original>
